<compile_context>
chip_gen: v6e
topology: v6e:2x2x1
jax: 0.10.0
libtpu: 0.0.40
codegen_flags: <defaults>
</compile_context>

<pallas_src>
import math

import jax
import jax.numpy as jnp
from jax.experimental import pallas as pl
from jax.experimental.pallas import tpu as pltpu

K_IN = 28 * 28        # 784 (multiple of 8 sublanes; block == full dim on lanes)
H1 = 512
H2 = 512
TM_MAX = 1024         # batch tile for large batches


def _round_up(n, m):
    return ((n + m - 1) // m) * m


def _pick_tm(B):
    """Batch-tile size: big for large B, >=2 tiles for mid B (v7x megacore),
    single 8-row tile for tiny B."""
    if B >= 2 * TM_MAX:
        return TM_MAX
    if B >= 16:
        return _round_up(pl.cdiv(B, 2), 8)   # guarantees n_tiles >= 2
    return _round_up(max(B, 1), 8)


def _mlp_header_kernel(x_ref, w1_ref, b1_ref, w2_ref, b2_ref, o_ref):
    # Cast the streamed f32 activation tile to bf16 in-kernel (VPU), then
    # fc1 + relu with f32 MXU accumulation.
    x = x_ref[...].astype(jnp.bfloat16)
    h = jnp.dot(x, w1_ref[...], preferred_element_type=jnp.float32)
    h = jnp.maximum(h + b1_ref[...], 0.0)
    # fc2 + relu: activations back to bf16 for the bf16 MXU path.
    o = jnp.dot(h.astype(jnp.bfloat16), w2_ref[...],
                preferred_element_type=jnp.float32)
    o = jnp.maximum(o + b2_ref[...], 0.0)
    o_ref[...] = o.astype(o_ref.dtype)


def prepare_params(w1, b1, w2, b2):
    """One-time weight prep (do NOT call per-forward): bf16 weights,
    biases as (1, out) f32 rows.  No K padding."""
    w1p = w1.astype(jnp.bfloat16)            # (784, 512)
    w2p = w2.astype(jnp.bfloat16)            # (512, 512)
    b1p = b1.reshape(1, H1).astype(jnp.float32)
    b2p = b2.reshape(1, H2).astype(jnp.float32)
    return w1p, b1p, w2p, b2p


def mlp_header_forward(x, w1p, b1p, w2p, b2p):
    """Pallas TPU forward of MLP_header.

    x:   any shape whose trailing dims flatten to 784 (e.g. (B, 1, 28, 28))
    w1p: (784, 512) bf16   b1p: (1, 512) f32
    w2p: (512, 512) bf16   b2p: (1, 512) f32
    returns: (B, 512) float32
    """
    x2d = x.reshape(-1, K_IN)                # no cast, no pad: fed directly
    B = x2d.shape[0]

    TM = _pick_tm(B)
    n_tiles = pl.cdiv(B, TM)

    cost = pl.CostEstimate(
        flops=2 * B * (K_IN * H1 + H1 * H2),
        transcendentals=0,
        bytes_accessed=(B * K_IN * 4           # x (f32, read once)
                        + K_IN * H1 * 2        # W1 (bf16)
                        + H1 * H2 * 2          # W2 (bf16)
                        + (H1 + H2) * 4        # biases (f32)
                        + B * H2 * 4),         # output (f32)
    )

    out = pl.pallas_call(
        _mlp_header_kernel,
        out_shape=jax.ShapeDtypeStruct((B, H2), jnp.float32),
        grid_spec=pltpu.PrefetchScalarGridSpec(
            num_scalar_prefetch=0,
            grid=(n_tiles,),
            in_specs=[
                pl.BlockSpec((TM, K_IN), lambda i: (i, 0)),   # x tile (streamed)
                pl.BlockSpec((K_IN, H1), lambda i: (0, 0)),   # W1 (resident)
                pl.BlockSpec((1, H1), lambda i: (0, 0)),      # b1 (resident)
                pl.BlockSpec((H1, H2), lambda i: (0, 0)),     # W2 (resident)
                pl.BlockSpec((1, H2), lambda i: (0, 0)),      # b2 (resident)
            ],
            out_specs=pl.BlockSpec((TM, H2), lambda i: (i, 0)),
        ),
        compiler_params=pltpu.CompilerParams(
            dimension_semantics=("parallel",),
            # Explicit scoped-VMEM cap: above v5e's 16 MiB default, below
            # v7x's 64 MiB per-TC physical VMEM.
            vmem_limit_bytes=48 * 1024 * 1024,
        ),
        cost_estimate=cost,
    )(x2d, w1p, b1p, w2p, b2p)

    return out


def init_params(key):
    """Deterministic init matching torch.nn.Linear shapes (stored transposed)."""
    k1, k2, k3, k4 = jax.random.split(key, 4)
    bound1 = 1.0 / math.sqrt(K_IN)
    bound2 = 1.0 / math.sqrt(H1)
    w1 = jax.random.uniform(k1, (K_IN, H1), jnp.float32, -bound1, bound1)
    b1 = jax.random.uniform(k2, (H1,), jnp.float32, -bound1, bound1)
    w2 = jax.random.uniform(k3, (H1, H2), jnp.float32, -bound2, bound2)
    b2 = jax.random.uniform(k4, (H2,), jnp.float32, -bound2, bound2)
    return w1, b1, w2, b2


if __name__ == "__main__":
    key = jax.random.PRNGKey(0)
    kx, kp = jax.random.split(key)

    # Small MNIST-like batch: (B=2, C=1, H=28, W=28)
    x = jax.random.normal(kx, (2, 1, 28, 28), jnp.float32)
    w1, b1, w2, b2 = init_params(kp)

    # One-time weight prep (bf16 weights, reshaped biases) outside the forward.
    w1p, b1p, w2p, b2p = prepare_params(w1, b1, w2, b2)

    out = mlp_header_forward(x, w1p, b1p, w2p, b2p)
    out = jax.block_until_ready(out)

    # Reference in plain f32 JAX (same math as the PyTorch module); tolerance
    # relaxed because the kernel uses bf16 matmul inputs with f32 accumulation.
    x2d = x.reshape(-1, K_IN)
    ref = jnp.maximum(jnp.maximum(x2d @ w1 + b1, 0.0) @ w2 + b2, 0.0)
    assert out.shape == (2, H2)
    assert jnp.allclose(out, ref, atol=2e-2, rtol=2e-2), float(
        jnp.max(jnp.abs(out - ref)))

    print("KERNEL_OK")
</pallas_src>

<mosaic_0001>
module attributes {stable_mosaic.version = 11 : i64} {
  func.func @_mlp_header_kernel(%arg0: i32, %arg1: memref<8x784xf32, #tpu.memory_space<vmem>>, %arg2: memref<784x512xbf16, #tpu.memory_space<vmem>>, %arg3: memref<1x512xf32, #tpu.memory_space<vmem>>, %arg4: memref<512x512xbf16, #tpu.memory_space<vmem>>, %arg5: memref<1x512xf32, #tpu.memory_space<vmem>>, %arg6: memref<8x512xf32, #tpu.memory_space<vmem>>) attributes {dimension_semantics = [#tpu.dimension_semantics<parallel>], iteration_bounds = array<i64: 1>, scalar_prefetch = 0 : i64, scratch_operands = 0 : i64, tpu.core_type = #tpu.core_type<tc>, window_params = [{transform_indices = @transform_0, window_bounds = array<i64: 8, 784>}, {pipeline_mode = #tpu.pipeline_mode<synchronous>, transform_indices = @transform_1, window_bounds = array<i64: 784, 512>}, {pipeline_mode = #tpu.pipeline_mode<synchronous>, transform_indices = @transform_2, window_bounds = array<i64: 1, 512>}, {pipeline_mode = #tpu.pipeline_mode<synchronous>, transform_indices = @transform_3, window_bounds = array<i64: 512, 512>}, {pipeline_mode = #tpu.pipeline_mode<synchronous>, transform_indices = @transform_4, window_bounds = array<i64: 1, 512>}, {transform_indices = @transform_5, window_bounds = array<i64: 8, 512>}]} {
    %c0 = arith.constant 0 : index
    %c0_0 = arith.constant 0 : index
    %0 = vector.load %arg1[%c0, %c0_0] : memref<8x784xf32, #tpu.memory_space<vmem>>, vector<8x784xf32>
    %1 = arith.truncf %0 : vector<8x784xf32> to vector<8x784xbf16>
    %c0_1 = arith.constant 0 : index
    %c0_2 = arith.constant 0 : index
    %2 = vector.load %arg2[%c0_1, %c0_2] : memref<784x512xbf16, #tpu.memory_space<vmem>>, vector<784x512xbf16>
    %cst = arith.constant dense<0.000000e+00> : vector<8x512xf32>
    %3 = tpu.matmul %1, %2, %cst {dimension_numbers = #tpu.dot_dimension_numbers<[1], [0], [0], [1], [0, 0, 1, 1], [], []>} : vector<8x784xbf16>, vector<784x512xbf16>, vector<8x512xf32> -> vector<8x512xf32>
    %c0_3 = arith.constant 0 : index
    %c0_4 = arith.constant 0 : index
    %4 = vector.load %arg3[%c0_3, %c0_4] : memref<1x512xf32, #tpu.memory_space<vmem>>, vector<1x512xf32>
    %5 = vector.broadcast %4 : vector<1x512xf32> to vector<8x512xf32>
    %6 = arith.addf %3, %5 : vector<8x512xf32>
    %cst_5 = arith.constant 0.000000e+00 : f32
    %7 = vector.broadcast %cst_5 : f32 to vector<8x512xf32>
    %8 = arith.maximumf %6, %7 : vector<8x512xf32>
    %9 = arith.truncf %8 : vector<8x512xf32> to vector<8x512xbf16>
    %c0_6 = arith.constant 0 : index
    %c0_7 = arith.constant 0 : index
    %10 = vector.load %arg4[%c0_6, %c0_7] : memref<512x512xbf16, #tpu.memory_space<vmem>>, vector<512x512xbf16>
    %cst_8 = arith.constant dense<0.000000e+00> : vector<8x512xf32>
    %11 = tpu.matmul %9, %10, %cst_8 {dimension_numbers = #tpu.dot_dimension_numbers<[1], [0], [0], [1], [0, 0, 1, 1], [], []>} : vector<8x512xbf16>, vector<512x512xbf16>, vector<8x512xf32> -> vector<8x512xf32>
    %c0_9 = arith.constant 0 : index
    %c0_10 = arith.constant 0 : index
    %12 = vector.load %arg5[%c0_9, %c0_10] : memref<1x512xf32, #tpu.memory_space<vmem>>, vector<1x512xf32>
    %13 = vector.broadcast %12 : vector<1x512xf32> to vector<8x512xf32>
    %14 = arith.addf %11, %13 : vector<8x512xf32>
    %cst_11 = arith.constant 0.000000e+00 : f32
    %15 = vector.broadcast %cst_11 : f32 to vector<8x512xf32>
    %16 = arith.maximumf %14, %15 : vector<8x512xf32>
    %c0_12 = arith.constant 0 : index
    %c0_13 = arith.constant 0 : index
    %17 = vector.load %arg6[%c0_12, %c0_13] : memref<8x512xf32, #tpu.memory_space<vmem>>, vector<8x512xf32>
    tpu.vector_store %arg6[%c0_12, %c0_13], %16 {strides = array<i32>} : memref<8x512xf32, #tpu.memory_space<vmem>>, vector<8x512xf32>,
    return
  }
  func.func @transform_0(%arg0: i32) -> (i32, i32) {
    %c0_i32 = arith.constant 0 : i32
    %c0_i32_0 = arith.constant 0 : i32
    return %arg0, %c0_i32 : i32, i32
  }
  func.func @transform_1(%arg0: i32) -> (i32, i32) {
    %c0_i32 = arith.constant 0 : i32
    %c0_i32_0 = arith.constant 0 : i32
    %c0_i32_1 = arith.constant 0 : i32
    return %c0_i32, %c0_i32_0 : i32, i32
  }
  func.func @transform_2(%arg0: i32) -> (i32, i32) {
    %c0_i32 = arith.constant 0 : i32
    %c0_i32_0 = arith.constant 0 : i32
    %c0_i32_1 = arith.constant 0 : i32
    return %c0_i32, %c0_i32_0 : i32, i32
  }
  func.func @transform_3(%arg0: i32) -> (i32, i32) {
    %c0_i32 = arith.constant 0 : i32
    %c0_i32_0 = arith.constant 0 : i32
    %c0_i32_1 = arith.constant 0 : i32
    return %c0_i32, %c0_i32_0 : i32, i32
  }
  func.func @transform_4(%arg0: i32) -> (i32, i32) {
    %c0_i32 = arith.constant 0 : i32
    %c0_i32_0 = arith.constant 0 : i32
    %c0_i32_1 = arith.constant 0 : i32
    return %c0_i32, %c0_i32_0 : i32, i32
  }
  func.func @transform_5(%arg0: i32) -> (i32, i32) {
    %c0_i32 = arith.constant 0 : i32
    %c0_i32_0 = arith.constant 0 : i32
    return %arg0, %c0_i32 : i32, i32
  }
}

</mosaic_0001>

<llo_original>
// kernel: tpu_custom_call.1
$region0: #{tpu_custom_call.1}
  #allocation0 [shape = 'u32[]', space=smem, size = 0x4, offset = 0x4, fixed_abs, tag = 'smem constant byte address 0x4 - core index']
  #allocation1 [shape = 'u32[144,128]{1,0:T(1,128)}', space=vmem, size = 0x12000, scoped, tag = 'internal scratch']
  %s0 = inlined_call_operand.hbm [shape: f32[2,784], index: 0, kind: input, shape index: {}]
  %s1 = inlined_call_operand.hbm [shape: bf16[784,512], index: 1, kind: input, shape index: {}]
  %s2 = inlined_call_operand.hbm [shape: f32[1,512], index: 2, kind: input, shape index: {}]
  %s3 = inlined_call_operand.hbm [shape: bf16[512,512], index: 3, kind: input, shape index: {}]
  %s4 = inlined_call_operand.vmem [shape: f32[1,512], index: 4, kind: input, shape index: {}]
  %s5 = inlined_call_operand.hbm [shape: f32[2,512], index: 5, kind: output, shape index: {}]
  %s6 = sld [smem:[#allocation0]]
  $region46: #{tpu_custom_call.1} parent=0
    _
  %s8 = ssub.s32 1, %s6
  %s9 = scalar_select 0, %s8, %s6
  $region1: #{tpu_custom_call.1} parent=0
    #allocation2 [shape = 'u8[28672]{0}', space=vmem, size = 0x7000, scoped, tag = 'input window, operand 0, single buffered']
    #allocation3 [shape = 's32[1]{0}', space=sflag, size = 0x4, scoped, tag = 'scoped memory for tpu_custom_call.1']
    #allocation4 [shape = 's32[1]{0}', space=sflag, size = 0x4, scoped, tag = 'scoped memory for tpu_custom_call.1']
    #allocation5 [shape = 'u8[802816]{0}', space=vmem, size = 0xc4000, scoped, tag = 'input window, operand 1, single buffered']
    #allocation6 [shape = 's32[1]{0}', space=sflag, size = 0x4, scoped, tag = 'scoped memory for tpu_custom_call.1']
    #allocation7 [shape = 'u8[2048]{0}', space=vmem, size = 0x800, scoped, tag = 'input window, operand 2, single buffered']
    #allocation8 [shape = 'u8[524288]{0}', space=vmem, size = 0x80000, scoped, tag = 'input window, operand 3, single buffered']
    #allocation9 [shape = 's32[1]{0}', space=sflag, size = 0x4, scoped, tag = 'scoped memory for tpu_custom_call.1']
    #allocation10 [shape = 'u8[16384]{0}', space=vmem, size = 0x4000, scoped, tag = 'output window, operand 0, single buffered']
    %10 = vsyncpa [#allocation3], 0
    %11 = vsyncpa [#allocation6], 0
    %12 = vsyncpa [#allocation9], 0
    %13 = vsyncpa [#allocation4], 0
    // Predicated region
    $region2: #{tpu_custom_call.1} parent=1 // pred_check
      _
    $region3: #{tpu_custom_call.1} parent=1 // pred_check_branch
      %15 = sbr.rel (0) target = $region5
    $region4: #{tpu_custom_call.1} parent=1 // pred_region
      %s17 = ssub.s32 896, 224
      %18 = vsyncadd [#allocation3], %s17
      %s19 = sshll.u32 [#allocation2], 4
      %s20 = int_to_ptr.vmem [resolvable:$true] %s19
      %25 = dma.hbm_to_vmem [thread:$0]  %s0, 224, %s20, [#allocation3], 224, 224, 14
    $region5: #{tpu_custom_call.1} parent=1 // pred_fallthru
      _
    // Predicated region
    $region6: #{tpu_custom_call.1} parent=1 // pred_check
      _
    $region7: #{tpu_custom_call.1} parent=1 // pred_check_branch
      %27 = sbr.rel (0) target = $region9
    $region8: #{tpu_custom_call.1} parent=1 // pred_region
      %s29 = ssub.s32 25088, 25088
      %30 = vsyncadd [#allocation6], %s29
      %s31 = sshll.u32 [#allocation5], 4
      %s32 = int_to_ptr.vmem [resolvable:$true] %s31
      %37 = dma.hbm_to_vmem [thread:$0]  %s1, 25088, %s32, [#allocation6], 256, 256, 16
    $region9: #{tpu_custom_call.1} parent=1 // pred_fallthru
      _
    // Predicated region
    $region10: #{tpu_custom_call.1} parent=1 // pred_check
      _
    $region11: #{tpu_custom_call.1} parent=1 // pred_check_branch
      %39 = sbr.rel (0) target = $region13
    $region12: #{tpu_custom_call.1} parent=1 // pred_region
      %s41 = ssub.s32 64, 64
      %42 = vsyncadd [#allocation6], %s41
      %s44 = sshll.u32 [#allocation7], 4
      %s45 = int_to_ptr.vmem [resolvable:$true] %s44
      %47 = dma.hbm_to_vmem [thread:$0]  %s2, 64, %s45, [#allocation6]
    $region13: #{tpu_custom_call.1} parent=1 // pred_fallthru
      _
    // Predicated region
    $region14: #{tpu_custom_call.1} parent=1 // pred_check
      _
    $region15: #{tpu_custom_call.1} parent=1 // pred_check_branch
      %49 = sbr.rel (0) target = $region17
    $region16: #{tpu_custom_call.1} parent=1 // pred_region
      %s51 = ssub.s32 16384, 16384
      %52 = vsyncadd [#allocation9], %s51
      %s53 = sshll.u32 [#allocation8], 4
      %s54 = int_to_ptr.vmem [resolvable:$true] %s53
      %59 = dma.hbm_to_vmem [thread:$0]  %s3, 16384, %s54, [#allocation9], 256, 256, 16
    $region17: #{tpu_custom_call.1} parent=1 // pred_fallthru
      _
    // Predicated region
    $region18: #{tpu_custom_call.1} parent=1 // pred_check
      _
    $region19: #{tpu_custom_call.1} parent=1 // pred_check_branch
      %61 = sbr.rel (0) target = $region21
    $region20: #{tpu_custom_call.1} parent=1 // pred_region
      _
    $region21: #{tpu_custom_call.1} parent=1 // pred_fallthru
      _
    // Predicated region
    $region22: #{tpu_custom_call.1} parent=1 // pred_check
      _
    $region23: #{tpu_custom_call.1} parent=1 // pred_check_branch
      %63 = sbr.rel (0) target = $region25
    $region24: #{tpu_custom_call.1} parent=1 // pred_region
      %64 = dma.done [#allocation3], 896
    $region25: #{tpu_custom_call.1} parent=1 // pred_fallthru
      _
    // Predicated region
    $region26: #{tpu_custom_call.1} parent=1 // pred_check
      _
    $region27: #{tpu_custom_call.1} parent=1 // pred_check_branch
      %66 = sbr.rel (0) target = $region29
    $region28: #{tpu_custom_call.1} parent=1 // pred_region
      %67 = dma.done [#allocation6], 25088
    $region29: #{tpu_custom_call.1} parent=1 // pred_fallthru
      _
    // Predicated region
    $region30: #{tpu_custom_call.1} parent=1 // pred_check
      _
    $region31: #{tpu_custom_call.1} parent=1 // pred_check_branch
      %69 = sbr.rel (0) target = $region33
    $region32: #{tpu_custom_call.1} parent=1 // pred_region
      %70 = dma.done [#allocation6], 64
    $region33: #{tpu_custom_call.1} parent=1 // pred_fallthru
      _
    // Predicated region
    $region34: #{tpu_custom_call.1} parent=1 // pred_check
      _
    $region35: #{tpu_custom_call.1} parent=1 // pred_check_branch
      %72 = sbr.rel (0) target = $region37
    $region36: #{tpu_custom_call.1} parent=1 // pred_region
      %73 = dma.done [#allocation9], 16384
    $region37: #{tpu_custom_call.1} parent=1 // pred_fallthru
      _
    %v75 = vld [vmem:[#allocation2] sm:$0xff]
    %v76 = vld [vmem:[#allocation2 + $0x8] sm:$0x3f]
    %v77 = vld [vmem:[#allocation2 + $0xe] sm:$0xff]
    %v78 = vld [vmem:[#allocation2 + $0x16] sm:$0x3f]
    %v79 = vld [vmem:[#allocation2 + $0x1c] sm:$0xff]
    %v80 = vld [vmem:[#allocation2 + $0x24] sm:$0x3f]
    %v81 = vld [vmem:[#allocation2 + $0x2a] sm:$0xff]
    %v82 = vld [vmem:[#allocation2 + $0x32] sm:$0x3f]
    %v91 = vcombine.low %v75, %v77
    %v92 = vcombine.high %v75, %v77
    %v93 = vcombine.low %v79, %v81
    %v94 = vcombine.high %v79, %v81
    %v96 = vunpack.c.l.s4 1983009808
    %v97 = vunpack.c.0.s8 %v96
    %v98 = vlaneseq
    %v99 = vshrl.u32 %v98, 7
    %v100 = vsub.s32 %v97, %v99
    %v101 = vrot.slane %v91, %v100
    %v103 = vunpack.c.l.s4 1983009808
    %v104 = vunpack.c.0.s8 %v103
    %v105 = vlaneseq
    %v106 = vshrl.u32 %v105, 7
    %v107 = vsub.s32 %v104, %v106
    %v108 = vrot.slane %v92, %v107
    %v110 = vunpack.c.l.s4 1983009808
    %v111 = vunpack.c.0.s8 %v110
    %v112 = vlaneseq
    %v113 = vshrl.u32 %v112, 7
    %v114 = vsub.s32 %v111, %v113
    %v115 = vrot.slane %v93, %v114
    %v117 = vunpack.c.l.s4 1983009808
    %v118 = vunpack.c.0.s8 %v117
    %v119 = vlaneseq
    %v120 = vshrl.u32 %v119, 7
    %v121 = vsub.s32 %v118, %v120
    %v122 = vrot.slane %v94, %v121
    %v123 = vcombine.low %v101, %v115
    %v124 = vcombine.high %v101, %v115
    %v125 = vcombine.low %v108, %v122
    %v126 = vcombine.high %v108, %v122
    %v127 = vcombine.low %v76, %v78
    %v128 = vcombine.high %v76, %v78
    %v129 = vcombine.low %v80, %v82
    %v130 = vcombine.high %v80, %v82
    %v132 = vunpack.c.l.s4 1983009808
    %v133 = vunpack.c.0.s8 %v132
    %v134 = vlaneseq
    %v135 = vshrl.u32 %v134, 7
    %v136 = vsub.s32 %v133, %v135
    %v137 = vrot.slane %v127, %v136
    %v139 = vunpack.c.l.s4 1983009808
    %v140 = vunpack.c.0.s8 %v139
    %v141 = vlaneseq
    %v142 = vshrl.u32 %v141, 7
    %v143 = vsub.s32 %v140, %v142
    %v144 = vrot.slane %v128, %v143
    %v146 = vunpack.c.l.s4 1983009808
    %v147 = vunpack.c.0.s8 %v146
    %v148 = vlaneseq
    %v149 = vshrl.u32 %v148, 7
    %v150 = vsub.s32 %v147, %v149
    %v151 = vrot.slane %v129, %v150
    %v153 = vunpack.c.l.s4 1983009808
    %v154 = vunpack.c.0.s8 %v153
    %v155 = vlaneseq
    %v156 = vshrl.u32 %v155, 7
    %v157 = vsub.s32 %v154, %v156
    %v158 = vrot.slane %v130, %v157
    %v159 = vcombine.low %v137, %v151
    %v160 = vcombine.high %v137, %v151
    %v161 = vcombine.low %v144, %v158
    %v169 = vpack.c.bf16 %v123, %v123
    %v170 = vpack.c.bf16 %v124, %v124
    %v171 = vpack.c.bf16 %v125, %v125
    %v172 = vpack.c.bf16 %v126, %v126
    %v173 = vpack.c.bf16 %v159, %v159
    %v174 = vpack.c.bf16 %v160, %v160
    %v175 = vpack.c.bf16 %v161, %v161
    %v176 = vld [vmem:[#allocation5] sm:$0xff]
    %v177 = vld [vmem:[#allocation5 + $0x8] sm:$0xff]
    %v178 = vld [vmem:[#allocation5 + $0x10] sm:$0xff]
    %v179 = vld [vmem:[#allocation5 + $0x18] sm:$0xff]
    %v180 = vld [vmem:[#allocation5 + $0x20] sm:$0xff]
    %v181 = vld [vmem:[#allocation5 + $0x28] sm:$0xff]
    %v182 = vld [vmem:[#allocation5 + $0x30] sm:$0xff]
    %v183 = vld [vmem:[#allocation5 + $0x38] sm:$0xff]
    %v184 = vld [vmem:[#allocation5 + $0x40] sm:$0xff]
    %v185 = vld [vmem:[#allocation5 + $0x48] sm:$0xff]
    %v186 = vld [vmem:[#allocation5 + $0x50] sm:$0xff]
    %v187 = vld [vmem:[#allocation5 + $0x58] sm:$0xff]
    %v188 = vld [vmem:[#allocation5 + $0x60] sm:$0xff]
    %v189 = vld [vmem:[#allocation5 + $0x68] sm:$0xff]
    %v190 = vld [vmem:[#allocation5 + $0x70] sm:$0xff]
    %v191 = vld [vmem:[#allocation5 + $0x78] sm:$0xff]
    %v192 = vld [vmem:[#allocation5 + $0x80] sm:$0xff]
    %v193 = vld [vmem:[#allocation5 + $0x88] sm:$0xff]
    %v194 = vld [vmem:[#allocation5 + $0x90] sm:$0xff]
    %v195 = vld [vmem:[#allocation5 + $0x98] sm:$0xff]
    %v196 = vld [vmem:[#allocation5 + $0xa0] sm:$0xff]
    %v197 = vld [vmem:[#allocation5 + $0xa8] sm:$0xff]
    %v198 = vld [vmem:[#allocation5 + $0xb0] sm:$0xff]
    %v199 = vld [vmem:[#allocation5 + $0xb8] sm:$0xff]
    %v200 = vld [vmem:[#allocation5 + $0xc0] sm:$0xff]
    %v201 = vld [vmem:[#allocation5 + $0xc8] sm:$0xff]
    %v202 = vld [vmem:[#allocation5 + $0xd0] sm:$0xff]
    %v203 = vld [vmem:[#allocation5 + $0xd8] sm:$0xff]
    %v204 = vld [vmem:[#allocation5 + $0xe0] sm:$0xff]
    %v205 = vld [vmem:[#allocation5 + $0xe8] sm:$0xff]
    %v206 = vld [vmem:[#allocation5 + $0xf0] sm:$0xff]
    %v207 = vld [vmem:[#allocation5 + $0xf8] sm:$0xff]
    %v208 = vld [vmem:[#allocation5 + $0x100] sm:$0xff]
    %v209 = vld [vmem:[#allocation5 + $0x108] sm:$0xff]
    %v210 = vld [vmem:[#allocation5 + $0x110] sm:$0xff]
    %v211 = vld [vmem:[#allocation5 + $0x118] sm:$0xff]
    %v212 = vld [vmem:[#allocation5 + $0x120] sm:$0xff]
    %v213 = vld [vmem:[#allocation5 + $0x128] sm:$0xff]
    %v214 = vld [vmem:[#allocation5 + $0x130] sm:$0xff]
    %v215 = vld [vmem:[#allocation5 + $0x138] sm:$0xff]
    %v216 = vld [vmem:[#allocation5 + $0x140] sm:$0xff]
    %v217 = vld [vmem:[#allocation5 + $0x148] sm:$0xff]
    %v218 = vld [vmem:[#allocation5 + $0x150] sm:$0xff]
    %v219 = vld [vmem:[#allocation5 + $0x158] sm:$0xff]
    %v220 = vld [vmem:[#allocation5 + $0x160] sm:$0xff]
    %v221 = vld [vmem:[#allocation5 + $0x168] sm:$0xff]
    %v222 = vld [vmem:[#allocation5 + $0x170] sm:$0xff]
    %v223 = vld [vmem:[#allocation5 + $0x178] sm:$0xff]
    %v224 = vld [vmem:[#allocation5 + $0x180] sm:$0xff]
    %v225 = vld [vmem:[#allocation5 + $0x188] sm:$0xff]
    %v226 = vld [vmem:[#allocation5 + $0x190] sm:$0xff]
    %v227 = vld [vmem:[#allocation5 + $0x198] sm:$0xff]
    %v228 = vld [vmem:[#allocation5 + $0x1a0] sm:$0xff]
    %v229 = vld [vmem:[#allocation5 + $0x1a8] sm:$0xff]
    %v230 = vld [vmem:[#allocation5 + $0x1b0] sm:$0xff]
    %v231 = vld [vmem:[#allocation5 + $0x1b8] sm:$0xff]
    %v232 = vld [vmem:[#allocation5 + $0x1c0] sm:$0xff]
    %v233 = vld [vmem:[#allocation5 + $0x1c8] sm:$0xff]
    %v234 = vld [vmem:[#allocation5 + $0x1d0] sm:$0xff]
    %v235 = vld [vmem:[#allocation5 + $0x1d8] sm:$0xff]
    %v236 = vld [vmem:[#allocation5 + $0x1e0] sm:$0xff]
    %v237 = vld [vmem:[#allocation5 + $0x1e8] sm:$0xff]
    %v238 = vld [vmem:[#allocation5 + $0x1f0] sm:$0xff]
    %v239 = vld [vmem:[#allocation5 + $0x1f8] sm:$0xff]
    %v240 = vld [vmem:[#allocation5 + $0x200] sm:$0xff]
    %v241 = vld [vmem:[#allocation5 + $0x208] sm:$0xff]
    %v242 = vld [vmem:[#allocation5 + $0x210] sm:$0xff]
    %v243 = vld [vmem:[#allocation5 + $0x218] sm:$0xff]
    %v244 = vld [vmem:[#allocation5 + $0x220] sm:$0xff]
    %v245 = vld [vmem:[#allocation5 + $0x228] sm:$0xff]
    %v246 = vld [vmem:[#allocation5 + $0x230] sm:$0xff]
    %v247 = vld [vmem:[#allocation5 + $0x238] sm:$0xff]
    %v248 = vld [vmem:[#allocation5 + $0x240] sm:$0xff]
    %v249 = vld [vmem:[#allocation5 + $0x248] sm:$0xff]
    %v250 = vld [vmem:[#allocation5 + $0x250] sm:$0xff]
    %v251 = vld [vmem:[#allocation5 + $0x258] sm:$0xff]
    %v252 = vld [vmem:[#allocation5 + $0x260] sm:$0xff]
    %v253 = vld [vmem:[#allocation5 + $0x268] sm:$0xff]
    %v254 = vld [vmem:[#allocation5 + $0x270] sm:$0xff]
    %v255 = vld [vmem:[#allocation5 + $0x278] sm:$0xff]
    %v256 = vld [vmem:[#allocation5 + $0x280] sm:$0xff]
    %v257 = vld [vmem:[#allocation5 + $0x288] sm:$0xff]
    %v258 = vld [vmem:[#allocation5 + $0x290] sm:$0xff]
    %v259 = vld [vmem:[#allocation5 + $0x298] sm:$0xff]
    %v260 = vld [vmem:[#allocation5 + $0x2a0] sm:$0xff]
    %v261 = vld [vmem:[#allocation5 + $0x2a8] sm:$0xff]
    %v262 = vld [vmem:[#allocation5 + $0x2b0] sm:$0xff]
    %v263 = vld [vmem:[#allocation5 + $0x2b8] sm:$0xff]
    %v264 = vld [vmem:[#allocation5 + $0x2c0] sm:$0xff]
    %v265 = vld [vmem:[#allocation5 + $0x2c8] sm:$0xff]
    %v266 = vld [vmem:[#allocation5 + $0x2d0] sm:$0xff]
    %v267 = vld [vmem:[#allocation5 + $0x2d8] sm:$0xff]
    %v268 = vld [vmem:[#allocation5 + $0x2e0] sm:$0xff]
    %v269 = vld [vmem:[#allocation5 + $0x2e8] sm:$0xff]
    %v270 = vld [vmem:[#allocation5 + $0x2f0] sm:$0xff]
    %v271 = vld [vmem:[#allocation5 + $0x2f8] sm:$0xff]
    %v272 = vld [vmem:[#allocation5 + $0x300] sm:$0xff]
    %v273 = vld [vmem:[#allocation5 + $0x308] sm:$0xff]
    %v274 = vld [vmem:[#allocation5 + $0x310] sm:$0xff]
    %v275 = vld [vmem:[#allocation5 + $0x318] sm:$0xff]
    %v276 = vld [vmem:[#allocation5 + $0x320] sm:$0xff]
    %v277 = vld [vmem:[#allocation5 + $0x328] sm:$0xff]
    %v278 = vld [vmem:[#allocation5 + $0x330] sm:$0xff]
    %v279 = vld [vmem:[#allocation5 + $0x338] sm:$0xff]
    %v280 = vld [vmem:[#allocation5 + $0x340] sm:$0xff]
    %v281 = vld [vmem:[#allocation5 + $0x348] sm:$0xff]
    %v282 = vld [vmem:[#allocation5 + $0x350] sm:$0xff]
    %v283 = vld [vmem:[#allocation5 + $0x358] sm:$0xff]
    %v284 = vld [vmem:[#allocation5 + $0x360] sm:$0xff]
    %v285 = vld [vmem:[#allocation5 + $0x368] sm:$0xff]
    %v286 = vld [vmem:[#allocation5 + $0x370] sm:$0xff]
    %v287 = vld [vmem:[#allocation5 + $0x378] sm:$0xff]
    %v288 = vld [vmem:[#allocation5 + $0x380] sm:$0xff]
    %v289 = vld [vmem:[#allocation5 + $0x388] sm:$0xff]
    %v290 = vld [vmem:[#allocation5 + $0x390] sm:$0xff]
    %v291 = vld [vmem:[#allocation5 + $0x398] sm:$0xff]
    %v292 = vld [vmem:[#allocation5 + $0x3a0] sm:$0xff]
    %v293 = vld [vmem:[#allocation5 + $0x3a8] sm:$0xff]
    %v294 = vld [vmem:[#allocation5 + $0x3b0] sm:$0xff]
    %v295 = vld [vmem:[#allocation5 + $0x3b8] sm:$0xff]
    %v296 = vld [vmem:[#allocation5 + $0x3c0] sm:$0xff]
    %v297 = vld [vmem:[#allocation5 + $0x3c8] sm:$0xff]
    %v298 = vld [vmem:[#allocation5 + $0x3d0] sm:$0xff]
    %v299 = vld [vmem:[#allocation5 + $0x3d8] sm:$0xff]
    %v300 = vld [vmem:[#allocation5 + $0x3e0] sm:$0xff]
    %v301 = vld [vmem:[#allocation5 + $0x3e8] sm:$0xff]
    %v302 = vld [vmem:[#allocation5 + $0x3f0] sm:$0xff]
    %v303 = vld [vmem:[#allocation5 + $0x3f8] sm:$0xff]
    %v304 = vld [vmem:[#allocation5 + $0x400] sm:$0xff]
    %v305 = vld [vmem:[#allocation5 + $0x408] sm:$0xff]
    %v306 = vld [vmem:[#allocation5 + $0x410] sm:$0xff]
    %v307 = vld [vmem:[#allocation5 + $0x418] sm:$0xff]
    %v308 = vld [vmem:[#allocation5 + $0x420] sm:$0xff]
    %v309 = vld [vmem:[#allocation5 + $0x428] sm:$0xff]
    %v310 = vld [vmem:[#allocation5 + $0x430] sm:$0xff]
    %v311 = vld [vmem:[#allocation5 + $0x438] sm:$0xff]
    %v312 = vld [vmem:[#allocation5 + $0x440] sm:$0xff]
    %v313 = vld [vmem:[#allocation5 + $0x448] sm:$0xff]
    %v314 = vld [vmem:[#allocation5 + $0x450] sm:$0xff]
    %v315 = vld [vmem:[#allocation5 + $0x458] sm:$0xff]
    %v316 = vld [vmem:[#allocation5 + $0x460] sm:$0xff]
    %v317 = vld [vmem:[#allocation5 + $0x468] sm:$0xff]
    %v318 = vld [vmem:[#allocation5 + $0x470] sm:$0xff]
    %v319 = vld [vmem:[#allocation5 + $0x478] sm:$0xff]
    %v320 = vld [vmem:[#allocation5 + $0x480] sm:$0xff]
    %v321 = vld [vmem:[#allocation5 + $0x488] sm:$0xff]
    %v322 = vld [vmem:[#allocation5 + $0x490] sm:$0xff]
    %v323 = vld [vmem:[#allocation5 + $0x498] sm:$0xff]
    %v324 = vld [vmem:[#allocation5 + $0x4a0] sm:$0xff]
    %v325 = vld [vmem:[#allocation5 + $0x4a8] sm:$0xff]
    %v326 = vld [vmem:[#allocation5 + $0x4b0] sm:$0xff]
    %v327 = vld [vmem:[#allocation5 + $0x4b8] sm:$0xff]
    %v328 = vld [vmem:[#allocation5 + $0x4c0] sm:$0xff]
    %v329 = vld [vmem:[#allocation5 + $0x4c8] sm:$0xff]
    %v330 = vld [vmem:[#allocation5 + $0x4d0] sm:$0xff]
    %v331 = vld [vmem:[#allocation5 + $0x4d8] sm:$0xff]
    %v332 = vld [vmem:[#allocation5 + $0x4e0] sm:$0xff]
    %v333 = vld [vmem:[#allocation5 + $0x4e8] sm:$0xff]
    %v334 = vld [vmem:[#allocation5 + $0x4f0] sm:$0xff]
    %v335 = vld [vmem:[#allocation5 + $0x4f8] sm:$0xff]
    %v336 = vld [vmem:[#allocation5 + $0x500] sm:$0xff]
    %v337 = vld [vmem:[#allocation5 + $0x508] sm:$0xff]
    %v338 = vld [vmem:[#allocation5 + $0x510] sm:$0xff]
    %v339 = vld [vmem:[#allocation5 + $0x518] sm:$0xff]
    %v340 = vld [vmem:[#allocation5 + $0x520] sm:$0xff]
    %v341 = vld [vmem:[#allocation5 + $0x528] sm:$0xff]
    %v342 = vld [vmem:[#allocation5 + $0x530] sm:$0xff]
    %v343 = vld [vmem:[#allocation5 + $0x538] sm:$0xff]
    %v344 = vld [vmem:[#allocation5 + $0x540] sm:$0xff]
    %v345 = vld [vmem:[#allocation5 + $0x548] sm:$0xff]
    %v346 = vld [vmem:[#allocation5 + $0x550] sm:$0xff]
    %v347 = vld [vmem:[#allocation5 + $0x558] sm:$0xff]
    %v348 = vld [vmem:[#allocation5 + $0x560] sm:$0xff]
    %v349 = vld [vmem:[#allocation5 + $0x568] sm:$0xff]
    %v350 = vld [vmem:[#allocation5 + $0x570] sm:$0xff]
    %v351 = vld [vmem:[#allocation5 + $0x578] sm:$0xff]
    %v352 = vld [vmem:[#allocation5 + $0x580] sm:$0xff]
    %v353 = vld [vmem:[#allocation5 + $0x588] sm:$0xff]
    %v354 = vld [vmem:[#allocation5 + $0x590] sm:$0xff]
    %v355 = vld [vmem:[#allocation5 + $0x598] sm:$0xff]
    %v356 = vld [vmem:[#allocation5 + $0x5a0] sm:$0xff]
    %v357 = vld [vmem:[#allocation5 + $0x5a8] sm:$0xff]
    %v358 = vld [vmem:[#allocation5 + $0x5b0] sm:$0xff]
    %v359 = vld [vmem:[#allocation5 + $0x5b8] sm:$0xff]
    %v360 = vld [vmem:[#allocation5 + $0x5c0] sm:$0xff]
    %v361 = vld [vmem:[#allocation5 + $0x5c8] sm:$0xff]
    %v362 = vld [vmem:[#allocation5 + $0x5d0] sm:$0xff]
    %v363 = vld [vmem:[#allocation5 + $0x5d8] sm:$0xff]
    %v364 = vld [vmem:[#allocation5 + $0x5e0] sm:$0xff]
    %v365 = vld [vmem:[#allocation5 + $0x5e8] sm:$0xff]
    %v366 = vld [vmem:[#allocation5 + $0x5f0] sm:$0xff]
    %v367 = vld [vmem:[#allocation5 + $0x5f8] sm:$0xff]
    %v368 = vld [vmem:[#allocation5 + $0x600] sm:$0xff]
    %v369 = vld [vmem:[#allocation5 + $0x608] sm:$0xff]
    %v370 = vld [vmem:[#allocation5 + $0x610] sm:$0xff]
    %v371 = vld [vmem:[#allocation5 + $0x618] sm:$0xff]
    %v372 = vld [vmem:[#allocation7] sm:$0xf]
    %v374 = vlaneseq
    %v375 = vshrl.u32 %v374, 7
    %v376 = vsub.s32 0, %v375
    %v377 = vrot.slane %v372, %v376
    %v378 = vlaneseq
    %v379 = vshrl.u32 %v378, 7
    %v380 = vsub.s32 1, %v379
    %v381 = vrot.slane %v372, %v380
    %v382 = vlaneseq
    %v383 = vshrl.u32 %v382, 7
    %v384 = vsub.s32 2, %v383
    %v385 = vrot.slane %v372, %v384
    %v386 = vlaneseq
    %v387 = vshrl.u32 %v386, 7
    %v388 = vsub.s32 3, %v387
    %v389 = vrot.slane %v372, %v388
    %v590 = vunpack.c.l.b16 %v176
    %v591 = vunpack.c.h.b16 %v176
    %v592 = vunpack.c.l.b16 %v177
    %v593 = vunpack.c.h.b16 %v177
    %v594 = vunpack.c.l.b16 %v178
    %v595 = vunpack.c.h.b16 %v178
    %v596 = vunpack.c.l.b16 %v179
    %v597 = vunpack.c.h.b16 %v179
    %v598 = vunpack.c.l.b16 %v180
    %v599 = vunpack.c.h.b16 %v180
    %v600 = vunpack.c.l.b16 %v181
    %v601 = vunpack.c.h.b16 %v181
    %v602 = vunpack.c.l.b16 %v182
    %v603 = vunpack.c.h.b16 %v182
    %v604 = vunpack.c.l.b16 %v183
    %v605 = vunpack.c.h.b16 %v183
    %v606 = vunpack.c.l.b16 %v184
    %v607 = vunpack.c.h.b16 %v184
    %v608 = vunpack.c.l.b16 %v185
    %v609 = vunpack.c.h.b16 %v185
    %v610 = vunpack.c.l.b16 %v186
    %v611 = vunpack.c.h.b16 %v186
    %v612 = vunpack.c.l.b16 %v187
    %v613 = vunpack.c.h.b16 %v187
    %v614 = vunpack.c.l.b16 %v188
    %v615 = vunpack.c.h.b16 %v188
    %v616 = vunpack.c.l.b16 %v189
    %v617 = vunpack.c.h.b16 %v189
    %v618 = vunpack.c.l.b16 %v190
    %v619 = vunpack.c.h.b16 %v190
    %v620 = vunpack.c.l.b16 %v191
    %v621 = vunpack.c.h.b16 %v191
    %v622 = vunpack.c.l.b16 %v192
    %v623 = vunpack.c.h.b16 %v192
    %v624 = vunpack.c.l.b16 %v193
    %v625 = vunpack.c.h.b16 %v193
    %v626 = vunpack.c.l.b16 %v194
    %v627 = vunpack.c.h.b16 %v194
    %v628 = vunpack.c.l.b16 %v195
    %v629 = vunpack.c.h.b16 %v195
    %v630 = vunpack.c.l.b16 %v196
    %v631 = vunpack.c.h.b16 %v196
    %v632 = vunpack.c.l.b16 %v197
    %v633 = vunpack.c.h.b16 %v197
    %v634 = vunpack.c.l.b16 %v198
    %v635 = vunpack.c.h.b16 %v198
    %v636 = vunpack.c.l.b16 %v199
    %v637 = vunpack.c.h.b16 %v199
    %v638 = vunpack.c.l.b16 %v200
    %v639 = vunpack.c.h.b16 %v200
    %v640 = vunpack.c.l.b16 %v201
    %v641 = vunpack.c.h.b16 %v201
    %v642 = vunpack.c.l.b16 %v202
    %v643 = vunpack.c.h.b16 %v202
    %v644 = vunpack.c.l.b16 %v203
    %v645 = vunpack.c.h.b16 %v203
    %v646 = vunpack.c.l.b16 %v204
    %v647 = vunpack.c.h.b16 %v204
    %v648 = vunpack.c.l.b16 %v205
    %v649 = vunpack.c.h.b16 %v205
    %v650 = vunpack.c.l.b16 %v206
    %v651 = vunpack.c.h.b16 %v206
    %v652 = vunpack.c.l.b16 %v207
    %v653 = vunpack.c.h.b16 %v207
    %v654 = vunpack.c.l.b16 %v208
    %v655 = vunpack.c.h.b16 %v208
    %v656 = vunpack.c.l.b16 %v209
    %v657 = vunpack.c.h.b16 %v209
    %v658 = vunpack.c.l.b16 %v210
    %v659 = vunpack.c.h.b16 %v210
    %v660 = vunpack.c.l.b16 %v211
    %v661 = vunpack.c.h.b16 %v211
    %v662 = vunpack.c.l.b16 %v212
    %v663 = vunpack.c.h.b16 %v212
    %v664 = vunpack.c.l.b16 %v213
    %v665 = vunpack.c.h.b16 %v213
    %v666 = vunpack.c.l.b16 %v214
    %v667 = vunpack.c.h.b16 %v214
    %v668 = vunpack.c.l.b16 %v215
    %v669 = vunpack.c.h.b16 %v215
    %v670 = vunpack.c.l.b16 %v216
    %v671 = vunpack.c.h.b16 %v216
    %v672 = vunpack.c.l.b16 %v217
    %v673 = vunpack.c.h.b16 %v217
    %v674 = vunpack.c.l.b16 %v218
    %v675 = vunpack.c.h.b16 %v218
    %v676 = vunpack.c.l.b16 %v219
    %v677 = vunpack.c.h.b16 %v219
    %v678 = vunpack.c.l.b16 %v220
    %v679 = vunpack.c.h.b16 %v220
    %v680 = vunpack.c.l.b16 %v221
    %v681 = vunpack.c.h.b16 %v221
    %v682 = vunpack.c.l.b16 %v222
    %v683 = vunpack.c.h.b16 %v222
    %v684 = vunpack.c.l.b16 %v223
    %v685 = vunpack.c.h.b16 %v223
    %v686 = vunpack.c.l.b16 %v224
    %v687 = vunpack.c.h.b16 %v224
    %v688 = vunpack.c.l.b16 %v225
    %v689 = vunpack.c.h.b16 %v225
    %v690 = vunpack.c.l.b16 %v226
    %v691 = vunpack.c.h.b16 %v226
    %v692 = vunpack.c.l.b16 %v227
    %v693 = vunpack.c.h.b16 %v227
    %v694 = vunpack.c.l.b16 %v228
    %v695 = vunpack.c.h.b16 %v228
    %v696 = vunpack.c.l.b16 %v229
    %v697 = vunpack.c.h.b16 %v229
    %v698 = vunpack.c.l.b16 %v230
    %v699 = vunpack.c.h.b16 %v230
    %v700 = vunpack.c.l.b16 %v231
    %v701 = vunpack.c.h.b16 %v231
    %v702 = vunpack.c.l.b16 %v232
    %v703 = vunpack.c.h.b16 %v232
    %v704 = vunpack.c.l.b16 %v233
    %v705 = vunpack.c.h.b16 %v233
    %v706 = vunpack.c.l.b16 %v234
    %v707 = vunpack.c.h.b16 %v234
    %v708 = vunpack.c.l.b16 %v235
    %v709 = vunpack.c.h.b16 %v235
    %v710 = vunpack.c.l.b16 %v236
    %v711 = vunpack.c.h.b16 %v236
    %v712 = vunpack.c.l.b16 %v237
    %v713 = vunpack.c.h.b16 %v237
    %v714 = vunpack.c.l.b16 %v238
    %v715 = vunpack.c.h.b16 %v238
    %v716 = vunpack.c.l.b16 %v239
    %v717 = vunpack.c.h.b16 %v239
    %v718 = vunpack.c.l.b16 %v240
    %v719 = vunpack.c.h.b16 %v240
    %v720 = vunpack.c.l.b16 %v241
    %v721 = vunpack.c.h.b16 %v241
    %v722 = vunpack.c.l.b16 %v242
    %v723 = vunpack.c.h.b16 %v242
    %v724 = vunpack.c.l.b16 %v243
    %v725 = vunpack.c.h.b16 %v243
    %v726 = vunpack.c.l.b16 %v244
    %v727 = vunpack.c.h.b16 %v244
    %v728 = vunpack.c.l.b16 %v245
    %v729 = vunpack.c.h.b16 %v245
    %v730 = vunpack.c.l.b16 %v246
    %v731 = vunpack.c.h.b16 %v246
    %v732 = vunpack.c.l.b16 %v247
    %v733 = vunpack.c.h.b16 %v247
    %v734 = vunpack.c.l.b16 %v248
    %v735 = vunpack.c.h.b16 %v248
    %v736 = vunpack.c.l.b16 %v249
    %v737 = vunpack.c.h.b16 %v249
    %v738 = vunpack.c.l.b16 %v250
    %v739 = vunpack.c.h.b16 %v250
    %v740 = vunpack.c.l.b16 %v251
    %v741 = vunpack.c.h.b16 %v251
    %v742 = vunpack.c.l.b16 %v252
    %v743 = vunpack.c.h.b16 %v252
    %v744 = vunpack.c.l.b16 %v253
    %v745 = vunpack.c.h.b16 %v253
    %v746 = vunpack.c.l.b16 %v254
    %v747 = vunpack.c.h.b16 %v254
    %v748 = vunpack.c.l.b16 %v255
    %v749 = vunpack.c.h.b16 %v255
    %v750 = vunpack.c.l.b16 %v256
    %v751 = vunpack.c.h.b16 %v256
    %v752 = vunpack.c.l.b16 %v257
    %v753 = vunpack.c.h.b16 %v257
    %v754 = vunpack.c.l.b16 %v258
    %v755 = vunpack.c.h.b16 %v258
    %v756 = vunpack.c.l.b16 %v259
    %v757 = vunpack.c.h.b16 %v259
    %v758 = vunpack.c.l.b16 %v260
    %v759 = vunpack.c.h.b16 %v260
    %v760 = vunpack.c.l.b16 %v261
    %v761 = vunpack.c.h.b16 %v261
    %v762 = vunpack.c.l.b16 %v262
    %v763 = vunpack.c.h.b16 %v262
    %v764 = vunpack.c.l.b16 %v263
    %v765 = vunpack.c.h.b16 %v263
    %v766 = vunpack.c.l.b16 %v264
    %v767 = vunpack.c.h.b16 %v264
    %v768 = vunpack.c.l.b16 %v265
    %v769 = vunpack.c.h.b16 %v265
    %v770 = vunpack.c.l.b16 %v266
    %v771 = vunpack.c.h.b16 %v266
    %v772 = vunpack.c.l.b16 %v267
    %v773 = vunpack.c.h.b16 %v267
    %v774 = vunpack.c.l.b16 %v268
    %v775 = vunpack.c.h.b16 %v268
    %v776 = vunpack.c.l.b16 %v269
    %v777 = vunpack.c.h.b16 %v269
    %v778 = vunpack.c.l.b16 %v270
    %v779 = vunpack.c.h.b16 %v270
    %v780 = vunpack.c.l.b16 %v271
    %v781 = vunpack.c.h.b16 %v271
    %v782 = vunpack.c.l.b16 %v272
    %v783 = vunpack.c.h.b16 %v272
    %v784 = vunpack.c.l.b16 %v273
    %v785 = vunpack.c.h.b16 %v273
    %v786 = vunpack.c.l.b16 %v274
    %v787 = vunpack.c.h.b16 %v274
    %v788 = vunpack.c.l.b16 %v275
    %v789 = vunpack.c.h.b16 %v275
    %v790 = vunpack.c.l.b16 %v276
    %v791 = vunpack.c.h.b16 %v276
    %v792 = vunpack.c.l.b16 %v277
    %v793 = vunpack.c.h.b16 %v277
    %v794 = vunpack.c.l.b16 %v278
    %v795 = vunpack.c.h.b16 %v278
    %v796 = vunpack.c.l.b16 %v279
    %v797 = vunpack.c.h.b16 %v279
    %v798 = vunpack.c.l.b16 %v280
    %v799 = vunpack.c.h.b16 %v280
    %v800 = vunpack.c.l.b16 %v281
    %v801 = vunpack.c.h.b16 %v281
    %v802 = vunpack.c.l.b16 %v282
    %v803 = vunpack.c.h.b16 %v282
    %v804 = vunpack.c.l.b16 %v283
    %v805 = vunpack.c.h.b16 %v283
    %v806 = vunpack.c.l.b16 %v284
    %v807 = vunpack.c.h.b16 %v284
    %v808 = vunpack.c.l.b16 %v285
    %v809 = vunpack.c.h.b16 %v285
    %v810 = vunpack.c.l.b16 %v286
    %v811 = vunpack.c.h.b16 %v286
    %v812 = vunpack.c.l.b16 %v287
    %v813 = vunpack.c.h.b16 %v287
    %v814 = vunpack.c.l.b16 %v288
    %v815 = vunpack.c.h.b16 %v288
    %v816 = vunpack.c.l.b16 %v289
    %v817 = vunpack.c.h.b16 %v289
    %v818 = vunpack.c.l.b16 %v290
    %v819 = vunpack.c.h.b16 %v290
    %v820 = vunpack.c.l.b16 %v291
    %v821 = vunpack.c.h.b16 %v291
    %v822 = vunpack.c.l.b16 %v292
    %v823 = vunpack.c.h.b16 %v292
    %v824 = vunpack.c.l.b16 %v293
    %v825 = vunpack.c.h.b16 %v293
    %v826 = vunpack.c.l.b16 %v294
    %v827 = vunpack.c.h.b16 %v294
    %v828 = vunpack.c.l.b16 %v295
    %v829 = vunpack.c.h.b16 %v295
    %v830 = vunpack.c.l.b16 %v296
    %v831 = vunpack.c.h.b16 %v296
    %v832 = vunpack.c.l.b16 %v297
    %v833 = vunpack.c.h.b16 %v297
    %v834 = vunpack.c.l.b16 %v298
    %v835 = vunpack.c.h.b16 %v298
    %v836 = vunpack.c.l.b16 %v299
    %v837 = vunpack.c.h.b16 %v299
    %v838 = vunpack.c.l.b16 %v300
    %v839 = vunpack.c.h.b16 %v300
    %v840 = vunpack.c.l.b16 %v301
    %v841 = vunpack.c.h.b16 %v301
    %v842 = vunpack.c.l.b16 %v302
    %v843 = vunpack.c.h.b16 %v302
    %v844 = vunpack.c.l.b16 %v303
    %v845 = vunpack.c.h.b16 %v303
    %v846 = vunpack.c.l.b16 %v304
    %v847 = vunpack.c.h.b16 %v304
    %v848 = vunpack.c.l.b16 %v305
    %v849 = vunpack.c.h.b16 %v305
    %v850 = vunpack.c.l.b16 %v306
    %v851 = vunpack.c.h.b16 %v306
    %v852 = vunpack.c.l.b16 %v307
    %v853 = vunpack.c.h.b16 %v307
    %v854 = vunpack.c.l.b16 %v308
    %v855 = vunpack.c.h.b16 %v308
    %v856 = vunpack.c.l.b16 %v309
    %v857 = vunpack.c.h.b16 %v309
    %v858 = vunpack.c.l.b16 %v310
    %v859 = vunpack.c.h.b16 %v310
    %v860 = vunpack.c.l.b16 %v311
    %v861 = vunpack.c.h.b16 %v311
    %v862 = vunpack.c.l.b16 %v312
    %v863 = vunpack.c.h.b16 %v312
    %v864 = vunpack.c.l.b16 %v313
    %v865 = vunpack.c.h.b16 %v313
    %v866 = vunpack.c.l.b16 %v314
    %v867 = vunpack.c.h.b16 %v314
    %v868 = vunpack.c.l.b16 %v315
    %v869 = vunpack.c.h.b16 %v315
    %v870 = vunpack.c.l.b16 %v316
    %v871 = vunpack.c.h.b16 %v316
    %v872 = vunpack.c.l.b16 %v317
    %v873 = vunpack.c.h.b16 %v317
    %v874 = vunpack.c.l.b16 %v318
    %v875 = vunpack.c.h.b16 %v318
    %v876 = vunpack.c.l.b16 %v319
    %v877 = vunpack.c.h.b16 %v319
    %v878 = vunpack.c.l.b16 %v320
    %v879 = vunpack.c.h.b16 %v320
    %v880 = vunpack.c.l.b16 %v321
    %v881 = vunpack.c.h.b16 %v321
    %v882 = vunpack.c.l.b16 %v322
    %v883 = vunpack.c.h.b16 %v322
    %v884 = vunpack.c.l.b16 %v323
    %v885 = vunpack.c.h.b16 %v323
    %v886 = vunpack.c.l.b16 %v324
    %v887 = vunpack.c.h.b16 %v324
    %v888 = vunpack.c.l.b16 %v325
    %v889 = vunpack.c.h.b16 %v325
    %v890 = vunpack.c.l.b16 %v326
    %v891 = vunpack.c.h.b16 %v326
    %v892 = vunpack.c.l.b16 %v327
    %v893 = vunpack.c.h.b16 %v327
    %v894 = vunpack.c.l.b16 %v328
    %v895 = vunpack.c.h.b16 %v328
    %v896 = vunpack.c.l.b16 %v329
    %v897 = vunpack.c.h.b16 %v329
    %v898 = vunpack.c.l.b16 %v330
    %v899 = vunpack.c.h.b16 %v330
    %v900 = vunpack.c.l.b16 %v331
    %v901 = vunpack.c.h.b16 %v331
    %v902 = vunpack.c.l.b16 %v332
    %v903 = vunpack.c.h.b16 %v332
    %v904 = vunpack.c.l.b16 %v333
    %v905 = vunpack.c.h.b16 %v333
    %v906 = vunpack.c.l.b16 %v334
    %v907 = vunpack.c.h.b16 %v334
    %v908 = vunpack.c.l.b16 %v335
    %v909 = vunpack.c.h.b16 %v335
    %v910 = vunpack.c.l.b16 %v336
    %v911 = vunpack.c.h.b16 %v336
    %v912 = vunpack.c.l.b16 %v337
    %v913 = vunpack.c.h.b16 %v337
    %v914 = vunpack.c.l.b16 %v338
    %v915 = vunpack.c.h.b16 %v338
    %v916 = vunpack.c.l.b16 %v339
    %v917 = vunpack.c.h.b16 %v339
    %v918 = vunpack.c.l.b16 %v340
    %v919 = vunpack.c.h.b16 %v340
    %v920 = vunpack.c.l.b16 %v341
    %v921 = vunpack.c.h.b16 %v341
    %v922 = vunpack.c.l.b16 %v342
    %v923 = vunpack.c.h.b16 %v342
    %v924 = vunpack.c.l.b16 %v343
    %v925 = vunpack.c.h.b16 %v343
    %v926 = vunpack.c.l.b16 %v344
    %v927 = vunpack.c.h.b16 %v344
    %v928 = vunpack.c.l.b16 %v345
    %v929 = vunpack.c.h.b16 %v345
    %v930 = vunpack.c.l.b16 %v346
    %v931 = vunpack.c.h.b16 %v346
    %v932 = vunpack.c.l.b16 %v347
    %v933 = vunpack.c.h.b16 %v347
    %v934 = vunpack.c.l.b16 %v348
    %v935 = vunpack.c.h.b16 %v348
    %v936 = vunpack.c.l.b16 %v349
    %v937 = vunpack.c.h.b16 %v349
    %v938 = vunpack.c.l.b16 %v350
    %v939 = vunpack.c.h.b16 %v350
    %v940 = vunpack.c.l.b16 %v351
    %v941 = vunpack.c.h.b16 %v351
    %v942 = vunpack.c.l.b16 %v352
    %v943 = vunpack.c.h.b16 %v352
    %v944 = vunpack.c.l.b16 %v353
    %v945 = vunpack.c.h.b16 %v353
    %v946 = vunpack.c.l.b16 %v354
    %v947 = vunpack.c.h.b16 %v354
    %v948 = vunpack.c.l.b16 %v355
    %v949 = vunpack.c.h.b16 %v355
    %v950 = vunpack.c.l.b16 %v356
    %v951 = vunpack.c.h.b16 %v356
    %v952 = vunpack.c.l.b16 %v357
    %v953 = vunpack.c.h.b16 %v357
    %v954 = vunpack.c.l.b16 %v358
    %v955 = vunpack.c.h.b16 %v358
    %v956 = vunpack.c.l.b16 %v359
    %v957 = vunpack.c.h.b16 %v359
    %v958 = vunpack.c.l.b16 %v360
    %v959 = vunpack.c.h.b16 %v360
    %v960 = vunpack.c.l.b16 %v361
    %v961 = vunpack.c.h.b16 %v361
    %v962 = vunpack.c.l.b16 %v362
    %v963 = vunpack.c.h.b16 %v362
    %v964 = vunpack.c.l.b16 %v363
    %v965 = vunpack.c.h.b16 %v363
    %v966 = vunpack.c.l.b16 %v364
    %v967 = vunpack.c.h.b16 %v364
    %v968 = vunpack.c.l.b16 %v365
    %v969 = vunpack.c.h.b16 %v365
    %v970 = vunpack.c.l.b16 %v366
    %v971 = vunpack.c.h.b16 %v366
    %v972 = vunpack.c.l.b16 %v367
    %v973 = vunpack.c.h.b16 %v367
    %v974 = vunpack.c.l.b16 %v368
    %v975 = vunpack.c.h.b16 %v368
    %v976 = vunpack.c.l.b16 %v369
    %v977 = vunpack.c.h.b16 %v369
    %v978 = vunpack.c.l.b16 %v370
    %v979 = vunpack.c.h.b16 %v370
    %v980 = vunpack.c.l.b16 %v371
    %v981 = vunpack.c.h.b16 %v371
    %v982 = vpack.c.b16 %v594, %v590
    %v983 = vpack.c.b16 %v595, %v591
    %v984 = vpack.c.b16 %v596, %v592
    %v985 = vpack.c.b16 %v597, %v593
    %v986 = vpack.c.b16 %v602, %v598
    %v987 = vpack.c.b16 %v603, %v599
    %v988 = vpack.c.b16 %v604, %v600
    %v989 = vpack.c.b16 %v605, %v601
    %v990 = vpack.c.b16 %v610, %v606
    %v991 = vpack.c.b16 %v611, %v607
    %v992 = vpack.c.b16 %v612, %v608
    %v993 = vpack.c.b16 %v613, %v609
    %v994 = vpack.c.b16 %v618, %v614
    %v995 = vpack.c.b16 %v619, %v615
    %v996 = vpack.c.b16 %v620, %v616
    %v997 = vpack.c.b16 %v621, %v617
    %v998 = vpack.c.b16 %v626, %v622
    %v999 = vpack.c.b16 %v627, %v623
    %v1000 = vpack.c.b16 %v628, %v624
    %v1001 = vpack.c.b16 %v629, %v625
    %v1002 = vpack.c.b16 %v634, %v630
    %v1003 = vpack.c.b16 %v635, %v631
    %v1004 = vpack.c.b16 %v636, %v632
    %v1005 = vpack.c.b16 %v637, %v633
    %v1006 = vpack.c.b16 %v642, %v638
    %v1007 = vpack.c.b16 %v643, %v639
    %v1008 = vpack.c.b16 %v644, %v640
    %v1009 = vpack.c.b16 %v645, %v641
    %v1010 = vpack.c.b16 %v650, %v646
    %v1011 = vpack.c.b16 %v651, %v647
    %v1012 = vpack.c.b16 %v652, %v648
    %v1013 = vpack.c.b16 %v653, %v649
    %v1014 = vpack.c.b16 %v658, %v654
    %v1015 = vpack.c.b16 %v659, %v655
    %v1016 = vpack.c.b16 %v660, %v656
    %v1017 = vpack.c.b16 %v661, %v657
    %v1018 = vpack.c.b16 %v666, %v662
    %v1019 = vpack.c.b16 %v667, %v663
    %v1020 = vpack.c.b16 %v668, %v664
    %v1021 = vpack.c.b16 %v669, %v665
    %v1022 = vpack.c.b16 %v674, %v670
    %v1023 = vpack.c.b16 %v675, %v671
    %v1024 = vpack.c.b16 %v676, %v672
    %v1025 = vpack.c.b16 %v677, %v673
    %v1026 = vpack.c.b16 %v682, %v678
    %v1027 = vpack.c.b16 %v683, %v679
    %v1028 = vpack.c.b16 %v684, %v680
    %v1029 = vpack.c.b16 %v685, %v681
    %v1030 = vpack.c.b16 %v690, %v686
    %v1031 = vpack.c.b16 %v691, %v687
    %v1032 = vpack.c.b16 %v692, %v688
    %v1033 = vpack.c.b16 %v693, %v689
    %v1034 = vpack.c.b16 %v698, %v694
    %v1035 = vpack.c.b16 %v699, %v695
    %v1036 = vpack.c.b16 %v700, %v696
    %v1037 = vpack.c.b16 %v701, %v697
    %v1038 = vpack.c.b16 %v706, %v702
    %v1039 = vpack.c.b16 %v707, %v703
    %v1040 = vpack.c.b16 %v708, %v704
    %v1041 = vpack.c.b16 %v709, %v705
    %v1042 = vpack.c.b16 %v714, %v710
    %v1043 = vpack.c.b16 %v715, %v711
    %v1044 = vpack.c.b16 %v716, %v712
    %v1045 = vpack.c.b16 %v717, %v713
    %v1046 = vpack.c.b16 %v722, %v718
    %v1047 = vpack.c.b16 %v723, %v719
    %v1048 = vpack.c.b16 %v724, %v720
    %v1049 = vpack.c.b16 %v725, %v721
    %v1050 = vpack.c.b16 %v730, %v726
    %v1051 = vpack.c.b16 %v731, %v727
    %v1052 = vpack.c.b16 %v732, %v728
    %v1053 = vpack.c.b16 %v733, %v729
    %v1054 = vpack.c.b16 %v738, %v734
    %v1055 = vpack.c.b16 %v739, %v735
    %v1056 = vpack.c.b16 %v740, %v736
    %v1057 = vpack.c.b16 %v741, %v737
    %v1058 = vpack.c.b16 %v746, %v742
    %v1059 = vpack.c.b16 %v747, %v743
    %v1060 = vpack.c.b16 %v748, %v744
    %v1061 = vpack.c.b16 %v749, %v745
    %v1062 = vpack.c.b16 %v754, %v750
    %v1063 = vpack.c.b16 %v755, %v751
    %v1064 = vpack.c.b16 %v756, %v752
    %v1065 = vpack.c.b16 %v757, %v753
    %v1066 = vpack.c.b16 %v762, %v758
    %v1067 = vpack.c.b16 %v763, %v759
    %v1068 = vpack.c.b16 %v764, %v760
    %v1069 = vpack.c.b16 %v765, %v761
    %v1070 = vpack.c.b16 %v770, %v766
    %v1071 = vpack.c.b16 %v771, %v767
    %v1072 = vpack.c.b16 %v772, %v768
    %v1073 = vpack.c.b16 %v773, %v769
    %v1074 = vpack.c.b16 %v778, %v774
    %v1075 = vpack.c.b16 %v779, %v775
    %v1076 = vpack.c.b16 %v780, %v776
    %v1077 = vpack.c.b16 %v781, %v777
    %v1078 = vpack.c.b16 %v786, %v782
    %v1079 = vpack.c.b16 %v787, %v783
    %v1080 = vpack.c.b16 %v788, %v784
    %v1081 = vpack.c.b16 %v789, %v785
    %v1082 = vpack.c.b16 %v794, %v790
    %v1083 = vpack.c.b16 %v795, %v791
    %v1084 = vpack.c.b16 %v796, %v792
    %v1085 = vpack.c.b16 %v797, %v793
    %v1086 = vpack.c.b16 %v802, %v798
    %v1087 = vpack.c.b16 %v803, %v799
    %v1088 = vpack.c.b16 %v804, %v800
    %v1089 = vpack.c.b16 %v805, %v801
    %v1090 = vpack.c.b16 %v810, %v806
    %v1091 = vpack.c.b16 %v811, %v807
    %v1092 = vpack.c.b16 %v812, %v808
    %v1093 = vpack.c.b16 %v813, %v809
    %v1094 = vpack.c.b16 %v818, %v814
    %v1095 = vpack.c.b16 %v819, %v815
    %v1096 = vpack.c.b16 %v820, %v816
    %v1097 = vpack.c.b16 %v821, %v817
    %v1098 = vpack.c.b16 %v826, %v822
    %v1099 = vpack.c.b16 %v827, %v823
    %v1100 = vpack.c.b16 %v828, %v824
    %v1101 = vpack.c.b16 %v829, %v825
    %v1102 = vpack.c.b16 %v834, %v830
    %v1103 = vpack.c.b16 %v835, %v831
    %v1104 = vpack.c.b16 %v836, %v832
    %v1105 = vpack.c.b16 %v837, %v833
    %v1106 = vpack.c.b16 %v842, %v838
    %v1107 = vpack.c.b16 %v843, %v839
    %v1108 = vpack.c.b16 %v844, %v840
    %v1109 = vpack.c.b16 %v845, %v841
    %v1110 = vpack.c.b16 %v850, %v846
    %v1111 = vpack.c.b16 %v851, %v847
    %v1112 = vpack.c.b16 %v852, %v848
    %v1113 = vpack.c.b16 %v853, %v849
    %v1114 = vpack.c.b16 %v858, %v854
    %v1115 = vpack.c.b16 %v859, %v855
    %v1116 = vpack.c.b16 %v860, %v856
    %v1117 = vpack.c.b16 %v861, %v857
    %v1118 = vpack.c.b16 %v866, %v862
    %v1119 = vpack.c.b16 %v867, %v863
    %v1120 = vpack.c.b16 %v868, %v864
    %v1121 = vpack.c.b16 %v869, %v865
    %v1122 = vpack.c.b16 %v874, %v870
    %v1123 = vpack.c.b16 %v875, %v871
    %v1124 = vpack.c.b16 %v876, %v872
    %v1125 = vpack.c.b16 %v877, %v873
    %v1126 = vpack.c.b16 %v882, %v878
    %v1127 = vpack.c.b16 %v883, %v879
    %v1128 = vpack.c.b16 %v884, %v880
    %v1129 = vpack.c.b16 %v885, %v881
    %v1130 = vpack.c.b16 %v890, %v886
    %v1131 = vpack.c.b16 %v891, %v887
    %v1132 = vpack.c.b16 %v892, %v888
    %v1133 = vpack.c.b16 %v893, %v889
    %v1134 = vpack.c.b16 %v898, %v894
    %v1135 = vpack.c.b16 %v899, %v895
    %v1136 = vpack.c.b16 %v900, %v896
    %v1137 = vpack.c.b16 %v901, %v897
    %v1138 = vpack.c.b16 %v906, %v902
    %v1139 = vpack.c.b16 %v907, %v903
    %v1140 = vpack.c.b16 %v908, %v904
    %v1141 = vpack.c.b16 %v909, %v905
    %v1142 = vpack.c.b16 %v914, %v910
    %v1143 = vpack.c.b16 %v915, %v911
    %v1144 = vpack.c.b16 %v916, %v912
    %v1145 = vpack.c.b16 %v917, %v913
    %v1146 = vpack.c.b16 %v922, %v918
    %v1147 = vpack.c.b16 %v923, %v919
    %v1148 = vpack.c.b16 %v924, %v920
    %v1149 = vpack.c.b16 %v925, %v921
    %v1150 = vpack.c.b16 %v930, %v926
    %v1151 = vpack.c.b16 %v931, %v927
    %v1152 = vpack.c.b16 %v932, %v928
    %v1153 = vpack.c.b16 %v933, %v929
    %v1154 = vpack.c.b16 %v938, %v934
    %v1155 = vpack.c.b16 %v939, %v935
    %v1156 = vpack.c.b16 %v940, %v936
    %v1157 = vpack.c.b16 %v941, %v937
    %v1158 = vpack.c.b16 %v946, %v942
    %v1159 = vpack.c.b16 %v947, %v943
    %v1160 = vpack.c.b16 %v948, %v944
    %v1161 = vpack.c.b16 %v949, %v945
    %v1162 = vpack.c.b16 %v954, %v950
    %v1163 = vpack.c.b16 %v955, %v951
    %v1164 = vpack.c.b16 %v956, %v952
    %v1165 = vpack.c.b16 %v957, %v953
    %v1166 = vpack.c.b16 %v962, %v958
    %v1167 = vpack.c.b16 %v963, %v959
    %v1168 = vpack.c.b16 %v964, %v960
    %v1169 = vpack.c.b16 %v965, %v961
    %v1170 = vpack.c.b16 %v970, %v966
    %v1171 = vpack.c.b16 %v971, %v967
    %v1172 = vpack.c.b16 %v972, %v968
    %v1173 = vpack.c.b16 %v973, %v969
    %v1174 = vpack.c.b16 %v978, %v974
    %v1175 = vpack.c.b16 %v979, %v975
    %v1176 = vpack.c.b16 %v980, %v976
    %v1177 = vpack.c.b16 %v981, %v977
    %vm1374 = vcmask 130048
    %v1376 = vsel %vm1374, %v175, 0
    %1378 = vmatprep.subr.bf16.mxu0 %v1011
    %1379 = vmatpush1.bf16.msra.mxu0 %v1010
    %1380 = vmatprep.subr.bf16.mxu0 %v1007
    %1381 = vmatpush1.bf16.msra.mxu0 %v1006
    %1382 = vmatprep.subr.bf16.mxu0 %v1003
    %1383 = vmatpush1.bf16.msra.mxu0 %v1002
    %1384 = vmatprep.subr.bf16.mxu0 %v999
    %1385 = vmatpush1.bf16.msra.mxu0 %v998
    %1386 = vmatprep.subr.bf16.mxu0 %v995
    %1387 = vmatpush1.bf16.msra.mxu0 %v994
    %1388 = vmatprep.subr.bf16.mxu0 %v991
    %1389 = vmatpush1.bf16.msra.mxu0 %v990
    %1390 = vmatprep.subr.bf16.mxu0 %v987
    %1391 = vmatpush1.bf16.msra.mxu0 %v986
    %1392 = vmatprep.subr.bf16.mxu0 %v983
    %1393 = vmatpush1.bf16.msra.mxu0 %v982
    %1394 = vmatprep.subr.bf16.mxu0 %v1043
    %1395 = vmatpush2.bf16.msra.mxu0 %v1042
    %1396 = vmatprep.subr.bf16.mxu0 %v1039
    %1397 = vmatpush2.bf16.msra.mxu0 %v1038
    %1398 = vmatprep.subr.bf16.mxu0 %v1035
    %1399 = vmatpush2.bf16.msra.mxu0 %v1034
    %1400 = vmatprep.subr.bf16.mxu0 %v1031
    %1401 = vmatpush2.bf16.msra.mxu0 %v1030
    %1402 = vmatprep.subr.bf16.mxu0 %v1027
    %1403 = vmatpush2.bf16.msra.mxu0 %v1026
    %1404 = vmatprep.subr.bf16.mxu0 %v1023
    %1405 = vmatpush2.bf16.msra.mxu0 %v1022
    %1406 = vmatprep.subr.bf16.mxu0 %v1019
    %1407 = vmatpush2.bf16.msra.mxu0 %v1018
    %1408 = vmatprep.subr.bf16.mxu0 %v1015
    %1409 = vmatpush2.bf16.msra.mxu0 %v1014
    %1410 = vmatprep.mubr.bf16.mxu0 %v170
    %1411 = vmatmul.mubr.bf16.gmra.mxu0 %v169
    %v1412 = vpop.f32.mrf.mxu0
    %v1413 = vadd.f32 %v377, %v1412
    %v1414 = vpop.f32.mrf.mxu0
    %v1415 = vadd.f32 %v381, %v1414
    %v1416 = vpop.f32.mrf.mxu0
    %v1417 = vpop.f32.mrf.mxu0
    %1418 = vdwg.mxu0
    %1419 = vmatprep.subr.bf16.mxu0 %v1075
    %1420 = vmatpush1.bf16.msra.mxu0 %v1074
    %1421 = vmatprep.subr.bf16.mxu0 %v1071
    %1422 = vmatpush1.bf16.msra.mxu0 %v1070
    %1423 = vmatprep.subr.bf16.mxu0 %v1067
    %1424 = vmatpush1.bf16.msra.mxu0 %v1066
    %1425 = vmatprep.subr.bf16.mxu0 %v1063
    %1426 = vmatpush1.bf16.msra.mxu0 %v1062
    %1427 = vmatprep.subr.bf16.mxu0 %v1059
    %1428 = vmatpush1.bf16.msra.mxu0 %v1058
    %1429 = vmatprep.subr.bf16.mxu0 %v1055
    %1430 = vmatpush1.bf16.msra.mxu0 %v1054
    %1431 = vmatprep.subr.bf16.mxu0 %v1051
    %1432 = vmatpush1.bf16.msra.mxu0 %v1050
    %1433 = vmatprep.subr.bf16.mxu0 %v1047
    %1434 = vmatpush1.bf16.msra.mxu0 %v1046
    %1435 = vmatprep.subr.bf16.mxu0 %v1107
    %1436 = vmatpush2.bf16.msra.mxu0 %v1106
    %1437 = vmatprep.subr.bf16.mxu0 %v1103
    %1438 = vmatpush2.bf16.msra.mxu0 %v1102
    %1439 = vmatprep.subr.bf16.mxu0 %v1099
    %1440 = vmatpush2.bf16.msra.mxu0 %v1098
    %1441 = vmatprep.subr.bf16.mxu0 %v1095
    %1442 = vmatpush2.bf16.msra.mxu0 %v1094
    %1443 = vmatprep.subr.bf16.mxu0 %v1091
    %1444 = vmatpush2.bf16.msra.mxu0 %v1090
    %1445 = vmatprep.subr.bf16.mxu0 %v1087
    %1446 = vmatpush2.bf16.msra.mxu0 %v1086
    %1447 = vmatprep.subr.bf16.mxu0 %v1083
    %1448 = vmatpush2.bf16.msra.mxu0 %v1082
    %1449 = vmatprep.subr.bf16.mxu0 %v1079
    %1450 = vmatpush2.bf16.msra.mxu0 %v1078
    %1451 = vmatprep.mubr.bf16.mxu0 %v172
    %1452 = vmatmul.mubr.bf16.gmra.mxu0 %v171
    %v1453 = vpop.f32.mrf.mxu0
    %v1454 = vadd.f32 %v1413, %v1453
    %v1455 = vpop.f32.mrf.mxu0
    %v1456 = vadd.f32 %v1415, %v1455
    %v1457 = vpop.f32.mrf.mxu0
    %v1458 = vpop.f32.mrf.mxu0
    %1459 = vdwg.mxu0
    %1460 = vmatprep.subr.bf16.mxu0 %v1139
    %1461 = vmatpush1.bf16.msra.mxu0 %v1138
    %1462 = vmatprep.subr.bf16.mxu0 %v1135
    %1463 = vmatpush1.bf16.msra.mxu0 %v1134
    %1464 = vmatprep.subr.bf16.mxu0 %v1131
    %1465 = vmatpush1.bf16.msra.mxu0 %v1130
    %1466 = vmatprep.subr.bf16.mxu0 %v1127
    %1467 = vmatpush1.bf16.msra.mxu0 %v1126
    %1468 = vmatprep.subr.bf16.mxu0 %v1123
    %1469 = vmatpush1.bf16.msra.mxu0 %v1122
    %1470 = vmatprep.subr.bf16.mxu0 %v1119
    %1471 = vmatpush1.bf16.msra.mxu0 %v1118
    %1472 = vmatprep.subr.bf16.mxu0 %v1115
    %1473 = vmatpush1.bf16.msra.mxu0 %v1114
    %1474 = vmatprep.subr.bf16.mxu0 %v1111
    %1475 = vmatpush1.bf16.msra.mxu0 %v1110
    %1476 = vmatprep.subr.bf16.mxu0 %v1171
    %1477 = vmatpush2.bf16.msra.mxu0 %v1170
    %1478 = vmatprep.subr.bf16.mxu0 %v1167
    %1479 = vmatpush2.bf16.msra.mxu0 %v1166
    %1480 = vmatprep.subr.bf16.mxu0 %v1163
    %1481 = vmatpush2.bf16.msra.mxu0 %v1162
    %1482 = vmatprep.subr.bf16.mxu0 %v1159
    %1483 = vmatpush2.bf16.msra.mxu0 %v1158
    %1484 = vmatprep.subr.bf16.mxu0 %v1155
    %1485 = vmatpush2.bf16.msra.mxu0 %v1154
    %1486 = vmatprep.subr.bf16.mxu0 %v1151
    %1487 = vmatpush2.bf16.msra.mxu0 %v1150
    %1488 = vmatprep.subr.bf16.mxu0 %v1147
    %1489 = vmatpush2.bf16.msra.mxu0 %v1146
    %1490 = vmatprep.subr.bf16.mxu0 %v1143
    %1491 = vmatpush2.bf16.msra.mxu0 %v1142
    %1492 = vmatprep.mubr.bf16.mxu0 %v174
    %1493 = vmatmul.mubr.bf16.gmra.mxu0 %v173
    %v1494 = vpop.f32.mrf.mxu0
    %v1495 = vadd.f32 %v1454, %v1494
    %v1496 = vpop.f32.mrf.mxu0
    %v1497 = vadd.f32 %v1456, %v1496
    %v1498 = vpop.f32.mrf.mxu0
    %v1499 = vpop.f32.mrf.mxu0
    %1500 = vdwg.mxu0
    %1501 = vmatprep.subr.bf16.mxu0 0
    %1502 = vmatpush1.bf16.msra.mxu0 0
    %1503 = vmatprep.subr.bf16.mxu0 0
    %1504 = vmatpush1.bf16.msra.mxu0 0
    %1505 = vmatprep.subr.bf16.mxu0 0
    %1506 = vmatpush1.bf16.msra.mxu0 0
    %1507 = vmatprep.subr.bf16.mxu0 0
    %1508 = vmatpush1.bf16.msra.mxu0 0
    %1509 = vmatprep.subr.bf16.mxu0 0
    %1510 = vmatpush1.bf16.msra.mxu0 0
    %1511 = vmatprep.subr.bf16.mxu0 0
    %1512 = vmatpush1.bf16.msra.mxu0 0
    %1513 = vmatprep.subr.bf16.mxu0 0
    %1514 = vmatpush1.bf16.msra.mxu0 0
    %1515 = vmatprep.subr.bf16.mxu0 %v1175
    %1516 = vmatpush1.bf16.msra.mxu0 %v1174
    %1517 = vmatprep.subr.bf16.mxu0 0
    %1518 = vmatpush2.bf16.msra.mxu0 0
    %1519 = vmatprep.subr.bf16.mxu0 0
    %1520 = vmatpush2.bf16.msra.mxu0 0
    %1521 = vmatprep.subr.bf16.mxu0 0
    %1522 = vmatpush2.bf16.msra.mxu0 0
    %1523 = vmatprep.subr.bf16.mxu0 0
    %1524 = vmatpush2.bf16.msra.mxu0 0
    %1525 = vmatprep.subr.bf16.mxu0 0
    %1526 = vmatpush2.bf16.msra.mxu0 0
    %1527 = vmatprep.subr.bf16.mxu0 0
    %1528 = vmatpush2.bf16.msra.mxu0 0
    %1529 = vmatprep.subr.bf16.mxu0 0
    %1530 = vmatpush2.bf16.msra.mxu0 0
    %1531 = vmatprep.subr.bf16.mxu0 0
    %1532 = vmatpush2.bf16.msra.mxu0 0
    %1533 = vmatprep.mubr.bf16.mxu0 0
    %1534 = vmatmul.mubr.bf16.gmra.mxu0 %v1376
    %v1535 = vpop.f32.mrf.mxu0
    %v1536 = vadd.f32 %v1495, %v1535
    %v1537 = vpop.f32.mrf.mxu0
    %v1538 = vadd.f32 %v1497, %v1537
    %v1539 = vpop.f32.mrf.mxu0
    %v1540 = vpop.f32.mrf.mxu0
    %1541 = vdwg.mxu0
    %1542 = vmatprep.subr.bf16.mxu0 %v1013
    %1543 = vmatpush1.bf16.msra.mxu0 %v1012
    %1544 = vmatprep.subr.bf16.mxu0 %v1009
    %1545 = vmatpush1.bf16.msra.mxu0 %v1008
    %1546 = vmatprep.subr.bf16.mxu0 %v1005
    %1547 = vmatpush1.bf16.msra.mxu0 %v1004
    %1548 = vmatprep.subr.bf16.mxu0 %v1001
    %1549 = vmatpush1.bf16.msra.mxu0 %v1000
    %1550 = vmatprep.subr.bf16.mxu0 %v997
    %1551 = vmatpush1.bf16.msra.mxu0 %v996
    %1552 = vmatprep.subr.bf16.mxu0 %v993
    %1553 = vmatpush1.bf16.msra.mxu0 %v992
    %1554 = vmatprep.subr.bf16.mxu0 %v989
    %1555 = vmatpush1.bf16.msra.mxu0 %v988
    %1556 = vmatprep.subr.bf16.mxu0 %v985
    %1557 = vmatpush1.bf16.msra.mxu0 %v984
    %1558 = vmatprep.subr.bf16.mxu0 %v1045
    %1559 = vmatpush2.bf16.msra.mxu0 %v1044
    %1560 = vmatprep.subr.bf16.mxu0 %v1041
    %1561 = vmatpush2.bf16.msra.mxu0 %v1040
    %1562 = vmatprep.subr.bf16.mxu0 %v1037
    %1563 = vmatpush2.bf16.msra.mxu0 %v1036
    %1564 = vmatprep.subr.bf16.mxu0 %v1033
    %1565 = vmatpush2.bf16.msra.mxu0 %v1032
    %1566 = vmatprep.subr.bf16.mxu0 %v1029
    %1567 = vmatpush2.bf16.msra.mxu0 %v1028
    %1568 = vmatprep.subr.bf16.mxu0 %v1025
    %1569 = vmatpush2.bf16.msra.mxu0 %v1024
    %1570 = vmatprep.subr.bf16.mxu0 %v1021
    %1571 = vmatpush2.bf16.msra.mxu0 %v1020
    %1572 = vmatprep.subr.bf16.mxu0 %v1017
    %1573 = vmatpush2.bf16.msra.mxu0 %v1016
    %1574 = vmatprep.mubr.bf16.mxu0 %v170
    %1575 = vmatmul.mubr.bf16.gmra.mxu0 %v169
    %v1576 = vpop.f32.mrf.mxu0
    %v1577 = vadd.f32 %v385, %v1576
    %v1578 = vpop.f32.mrf.mxu0
    %v1579 = vadd.f32 %v389, %v1578
    %v1580 = vpop.f32.mrf.mxu0
    %v1581 = vpop.f32.mrf.mxu0
    %1582 = vdwg.mxu0
    %1583 = vmatprep.subr.bf16.mxu0 %v1077
    %1584 = vmatpush1.bf16.msra.mxu0 %v1076
    %1585 = vmatprep.subr.bf16.mxu0 %v1073
    %1586 = vmatpush1.bf16.msra.mxu0 %v1072
    %1587 = vmatprep.subr.bf16.mxu0 %v1069
    %1588 = vmatpush1.bf16.msra.mxu0 %v1068
    %1589 = vmatprep.subr.bf16.mxu0 %v1065
    %1590 = vmatpush1.bf16.msra.mxu0 %v1064
    %1591 = vmatprep.subr.bf16.mxu0 %v1061
    %1592 = vmatpush1.bf16.msra.mxu0 %v1060
    %1593 = vmatprep.subr.bf16.mxu0 %v1057
    %1594 = vmatpush1.bf16.msra.mxu0 %v1056
    %1595 = vmatprep.subr.bf16.mxu0 %v1053
    %1596 = vmatpush1.bf16.msra.mxu0 %v1052
    %1597 = vmatprep.subr.bf16.mxu0 %v1049
    %1598 = vmatpush1.bf16.msra.mxu0 %v1048
    %1599 = vmatprep.subr.bf16.mxu0 %v1109
    %1600 = vmatpush2.bf16.msra.mxu0 %v1108
    %1601 = vmatprep.subr.bf16.mxu0 %v1105
    %1602 = vmatpush2.bf16.msra.mxu0 %v1104
    %1603 = vmatprep.subr.bf16.mxu0 %v1101
    %1604 = vmatpush2.bf16.msra.mxu0 %v1100
    %1605 = vmatprep.subr.bf16.mxu0 %v1097
    %1606 = vmatpush2.bf16.msra.mxu0 %v1096
    %1607 = vmatprep.subr.bf16.mxu0 %v1093
    %1608 = vmatpush2.bf16.msra.mxu0 %v1092
    %1609 = vmatprep.subr.bf16.mxu0 %v1089
    %1610 = vmatpush2.bf16.msra.mxu0 %v1088
    %1611 = vmatprep.subr.bf16.mxu0 %v1085
    %1612 = vmatpush2.bf16.msra.mxu0 %v1084
    %1613 = vmatprep.subr.bf16.mxu0 %v1081
    %1614 = vmatpush2.bf16.msra.mxu0 %v1080
    %1615 = vmatprep.mubr.bf16.mxu0 %v172
    %1616 = vmatmul.mubr.bf16.gmra.mxu0 %v171
    %v1617 = vpop.f32.mrf.mxu0
    %v1618 = vadd.f32 %v1577, %v1617
    %v1619 = vpop.f32.mrf.mxu0
    %v1620 = vadd.f32 %v1579, %v1619
    %v1621 = vpop.f32.mrf.mxu0
    %v1622 = vpop.f32.mrf.mxu0
    %1623 = vdwg.mxu0
    %1624 = vmatprep.subr.bf16.mxu0 %v1141
    %1625 = vmatpush1.bf16.msra.mxu0 %v1140
    %1626 = vmatprep.subr.bf16.mxu0 %v1137
    %1627 = vmatpush1.bf16.msra.mxu0 %v1136
    %1628 = vmatprep.subr.bf16.mxu0 %v1133
    %1629 = vmatpush1.bf16.msra.mxu0 %v1132
    %1630 = vmatprep.subr.bf16.mxu0 %v1129
    %1631 = vmatpush1.bf16.msra.mxu0 %v1128
    %1632 = vmatprep.subr.bf16.mxu0 %v1125
    %1633 = vmatpush1.bf16.msra.mxu0 %v1124
    %1634 = vmatprep.subr.bf16.mxu0 %v1121
    %1635 = vmatpush1.bf16.msra.mxu0 %v1120
    %1636 = vmatprep.subr.bf16.mxu0 %v1117
    %1637 = vmatpush1.bf16.msra.mxu0 %v1116
    %1638 = vmatprep.subr.bf16.mxu0 %v1113
    %1639 = vmatpush1.bf16.msra.mxu0 %v1112
    %1640 = vmatprep.subr.bf16.mxu0 %v1173
    %1641 = vmatpush2.bf16.msra.mxu0 %v1172
    %1642 = vmatprep.subr.bf16.mxu0 %v1169
    %1643 = vmatpush2.bf16.msra.mxu0 %v1168
    %1644 = vmatprep.subr.bf16.mxu0 %v1165
    %1645 = vmatpush2.bf16.msra.mxu0 %v1164
    %1646 = vmatprep.subr.bf16.mxu0 %v1161
    %1647 = vmatpush2.bf16.msra.mxu0 %v1160
    %1648 = vmatprep.subr.bf16.mxu0 %v1157
    %1649 = vmatpush2.bf16.msra.mxu0 %v1156
    %1650 = vmatprep.subr.bf16.mxu0 %v1153
    %1651 = vmatpush2.bf16.msra.mxu0 %v1152
    %1652 = vmatprep.subr.bf16.mxu0 %v1149
    %1653 = vmatpush2.bf16.msra.mxu0 %v1148
    %1654 = vmatprep.subr.bf16.mxu0 %v1145
    %1655 = vmatpush2.bf16.msra.mxu0 %v1144
    %1656 = vmatprep.mubr.bf16.mxu0 %v174
    %1657 = vmatmul.mubr.bf16.gmra.mxu0 %v173
    %v1658 = vpop.f32.mrf.mxu0
    %v1659 = vadd.f32 %v1618, %v1658
    %v1660 = vpop.f32.mrf.mxu0
    %v1661 = vadd.f32 %v1620, %v1660
    %v1662 = vpop.f32.mrf.mxu0
    %v1663 = vpop.f32.mrf.mxu0
    %1664 = vdwg.mxu0
    %1665 = vmatprep.subr.bf16.mxu0 0
    %1666 = vmatpush1.bf16.msra.mxu0 0
    %1667 = vmatprep.subr.bf16.mxu0 0
    %1668 = vmatpush1.bf16.msra.mxu0 0
    %1669 = vmatprep.subr.bf16.mxu0 0
    %1670 = vmatpush1.bf16.msra.mxu0 0
    %1671 = vmatprep.subr.bf16.mxu0 0
    %1672 = vmatpush1.bf16.msra.mxu0 0
    %1673 = vmatprep.subr.bf16.mxu0 0
    %1674 = vmatpush1.bf16.msra.mxu0 0
    %1675 = vmatprep.subr.bf16.mxu0 0
    %1676 = vmatpush1.bf16.msra.mxu0 0
    %1677 = vmatprep.subr.bf16.mxu0 0
    %1678 = vmatpush1.bf16.msra.mxu0 0
    %1679 = vmatprep.subr.bf16.mxu0 %v1177
    %1680 = vmatpush1.bf16.msra.mxu0 %v1176
    %1681 = vmatprep.subr.bf16.mxu0 0
    %1682 = vmatpush2.bf16.msra.mxu0 0
    %1683 = vmatprep.subr.bf16.mxu0 0
    %1684 = vmatpush2.bf16.msra.mxu0 0
    %1685 = vmatprep.subr.bf16.mxu0 0
    %1686 = vmatpush2.bf16.msra.mxu0 0
    %1687 = vmatprep.subr.bf16.mxu0 0
    %1688 = vmatpush2.bf16.msra.mxu0 0
    %1689 = vmatprep.subr.bf16.mxu0 0
    %1690 = vmatpush2.bf16.msra.mxu0 0
    %1691 = vmatprep.subr.bf16.mxu0 0
    %1692 = vmatpush2.bf16.msra.mxu0 0
    %1693 = vmatprep.subr.bf16.mxu0 0
    %1694 = vmatpush2.bf16.msra.mxu0 0
    %1695 = vmatprep.subr.bf16.mxu0 0
    %1696 = vmatpush2.bf16.msra.mxu0 0
    %1697 = vmatprep.mubr.bf16.mxu0 0
    %1698 = vmatmul.mubr.bf16.gmra.mxu0 %v1376
    %v1699 = vpop.f32.mrf.mxu0
    %v1700 = vadd.f32 %v1659, %v1699
    %v1701 = vpop.f32.mrf.mxu0
    %v1702 = vadd.f32 %v1661, %v1701
    %v1703 = vpop.f32.mrf.mxu0
    %v1704 = vpop.f32.mrf.mxu0
    %1705 = vdwg.mxu0
    %v1706 = vmax.f32 %v1536, 0.0
    %v1707 = vmax.f32 %v1538, 0.0
    %v1708 = vmax.f32 %v1700, 0.0
    %v1709 = vmax.f32 %v1702, 0.0
    %v1710 = vpack.c.bf16 %v1706, %v1706
    %v1711 = vpack.c.bf16 %v1707, %v1707
    %v1712 = vpack.c.bf16 %v1708, %v1708
    %v1713 = vpack.c.bf16 %v1709, %v1709
    %v1714 = vld [vmem:[#allocation8] sm:$0xff]
    %v1715 = vld [vmem:[#allocation8 + $0x8] sm:$0xff]
    %v1716 = vld [vmem:[#allocation8 + $0x10] sm:$0xff]
    %v1717 = vld [vmem:[#allocation8 + $0x18] sm:$0xff]
    %v1718 = vld [vmem:[#allocation8 + $0x20] sm:$0xff]
    %v1719 = vld [vmem:[#allocation8 + $0x28] sm:$0xff]
    %v1720 = vld [vmem:[#allocation8 + $0x30] sm:$0xff]
    %v1721 = vld [vmem:[#allocation8 + $0x38] sm:$0xff]
    %v1722 = vld [vmem:[#allocation8 + $0x40] sm:$0xff]
    %v1723 = vld [vmem:[#allocation8 + $0x48] sm:$0xff]
    %v1724 = vld [vmem:[#allocation8 + $0x50] sm:$0xff]
    %v1725 = vld [vmem:[#allocation8 + $0x58] sm:$0xff]
    %v1726 = vld [vmem:[#allocation8 + $0x60] sm:$0xff]
    %v1727 = vld [vmem:[#allocation8 + $0x68] sm:$0xff]
    %v1728 = vld [vmem:[#allocation8 + $0x70] sm:$0xff]
    %v1729 = vld [vmem:[#allocation8 + $0x78] sm:$0xff]
    %v1730 = vld [vmem:[#allocation8 + $0x80] sm:$0xff]
    %v1731 = vld [vmem:[#allocation8 + $0x88] sm:$0xff]
    %v1732 = vld [vmem:[#allocation8 + $0x90] sm:$0xff]
    %v1733 = vld [vmem:[#allocation8 + $0x98] sm:$0xff]
    %v1734 = vld [vmem:[#allocation8 + $0xa0] sm:$0xff]
    %v1735 = vld [vmem:[#allocation8 + $0xa8] sm:$0xff]
    %v1736 = vld [vmem:[#allocation8 + $0xb0] sm:$0xff]
    %v1737 = vld [vmem:[#allocation8 + $0xb8] sm:$0xff]
    %v1738 = vld [vmem:[#allocation8 + $0xc0] sm:$0xff]
    %v1739 = vld [vmem:[#allocation8 + $0xc8] sm:$0xff]
    %v1740 = vld [vmem:[#allocation8 + $0xd0] sm:$0xff]
    %v1741 = vld [vmem:[#allocation8 + $0xd8] sm:$0xff]
    %v1742 = vld [vmem:[#allocation8 + $0xe0] sm:$0xff]
    %v1743 = vld [vmem:[#allocation8 + $0xe8] sm:$0xff]
    %v1744 = vld [vmem:[#allocation8 + $0xf0] sm:$0xff]
    %v1745 = vld [vmem:[#allocation8 + $0xf8] sm:$0xff]
    %v1746 = vld [vmem:[#allocation8 + $0x100] sm:$0xff]
    %v1747 = vld [vmem:[#allocation8 + $0x108] sm:$0xff]
    %v1748 = vld [vmem:[#allocation8 + $0x110] sm:$0xff]
    %v1749 = vld [vmem:[#allocation8 + $0x118] sm:$0xff]
    %v1750 = vld [vmem:[#allocation8 + $0x120] sm:$0xff]
    %v1751 = vld [vmem:[#allocation8 + $0x128] sm:$0xff]
    %v1752 = vld [vmem:[#allocation8 + $0x130] sm:$0xff]
    %v1753 = vld [vmem:[#allocation8 + $0x138] sm:$0xff]
    %v1754 = vld [vmem:[#allocation8 + $0x140] sm:$0xff]
    %v1755 = vld [vmem:[#allocation8 + $0x148] sm:$0xff]
    %v1756 = vld [vmem:[#allocation8 + $0x150] sm:$0xff]
    %v1757 = vld [vmem:[#allocation8 + $0x158] sm:$0xff]
    %v1758 = vld [vmem:[#allocation8 + $0x160] sm:$0xff]
    %v1759 = vld [vmem:[#allocation8 + $0x168] sm:$0xff]
    %v1760 = vld [vmem:[#allocation8 + $0x170] sm:$0xff]
    %v1761 = vld [vmem:[#allocation8 + $0x178] sm:$0xff]
    %v1762 = vld [vmem:[#allocation8 + $0x180] sm:$0xff]
    %v1763 = vld [vmem:[#allocation8 + $0x188] sm:$0xff]
    %v1764 = vld [vmem:[#allocation8 + $0x190] sm:$0xff]
    %v1765 = vld [vmem:[#allocation8 + $0x198] sm:$0xff]
    %v1766 = vld [vmem:[#allocation8 + $0x1a0] sm:$0xff]
    %v1767 = vld [vmem:[#allocation8 + $0x1a8] sm:$0xff]
    %v1768 = vld [vmem:[#allocation8 + $0x1b0] sm:$0xff]
    %v1769 = vld [vmem:[#allocation8 + $0x1b8] sm:$0xff]
    %v1770 = vld [vmem:[#allocation8 + $0x1c0] sm:$0xff]
    %v1771 = vld [vmem:[#allocation8 + $0x1c8] sm:$0xff]
    %v1772 = vld [vmem:[#allocation8 + $0x1d0] sm:$0xff]
    %v1773 = vld [vmem:[#allocation8 + $0x1d8] sm:$0xff]
    %v1774 = vld [vmem:[#allocation8 + $0x1e0] sm:$0xff]
    %v1775 = vld [vmem:[#allocation8 + $0x1e8] sm:$0xff]
    %v1776 = vld [vmem:[#allocation8 + $0x1f0] sm:$0xff]
    %v1777 = vld [vmem:[#allocation8 + $0x1f8] sm:$0xff]
    %v1778 = vld [vmem:[#allocation8 + $0x200] sm:$0xff]
    %v1779 = vld [vmem:[#allocation8 + $0x208] sm:$0xff]
    %v1780 = vld [vmem:[#allocation8 + $0x210] sm:$0xff]
    %v1781 = vld [vmem:[#allocation8 + $0x218] sm:$0xff]
    %v1782 = vld [vmem:[#allocation8 + $0x220] sm:$0xff]
    %v1783 = vld [vmem:[#allocation8 + $0x228] sm:$0xff]
    %v1784 = vld [vmem:[#allocation8 + $0x230] sm:$0xff]
    %v1785 = vld [vmem:[#allocation8 + $0x238] sm:$0xff]
    %v1786 = vld [vmem:[#allocation8 + $0x240] sm:$0xff]
    %v1787 = vld [vmem:[#allocation8 + $0x248] sm:$0xff]
    %v1788 = vld [vmem:[#allocation8 + $0x250] sm:$0xff]
    %v1789 = vld [vmem:[#allocation8 + $0x258] sm:$0xff]
    %v1790 = vld [vmem:[#allocation8 + $0x260] sm:$0xff]
    %v1791 = vld [vmem:[#allocation8 + $0x268] sm:$0xff]
    %v1792 = vld [vmem:[#allocation8 + $0x270] sm:$0xff]
    %v1793 = vld [vmem:[#allocation8 + $0x278] sm:$0xff]
    %v1794 = vld [vmem:[#allocation8 + $0x280] sm:$0xff]
    %v1795 = vld [vmem:[#allocation8 + $0x288] sm:$0xff]
    %v1796 = vld [vmem:[#allocation8 + $0x290] sm:$0xff]
    %v1797 = vld [vmem:[#allocation8 + $0x298] sm:$0xff]
    %v1798 = vld [vmem:[#allocation8 + $0x2a0] sm:$0xff]
    %v1799 = vld [vmem:[#allocation8 + $0x2a8] sm:$0xff]
    %v1800 = vld [vmem:[#allocation8 + $0x2b0] sm:$0xff]
    %v1801 = vld [vmem:[#allocation8 + $0x2b8] sm:$0xff]
    %v1802 = vld [vmem:[#allocation8 + $0x2c0] sm:$0xff]
    %v1803 = vld [vmem:[#allocation8 + $0x2c8] sm:$0xff]
    %v1804 = vld [vmem:[#allocation8 + $0x2d0] sm:$0xff]
    %v1805 = vld [vmem:[#allocation8 + $0x2d8] sm:$0xff]
    %v1806 = vld [vmem:[#allocation8 + $0x2e0] sm:$0xff]
    %v1807 = vld [vmem:[#allocation8 + $0x2e8] sm:$0xff]
    %v1808 = vld [vmem:[#allocation8 + $0x2f0] sm:$0xff]
    %v1809 = vld [vmem:[#allocation8 + $0x2f8] sm:$0xff]
    %v1810 = vld [vmem:[#allocation8 + $0x300] sm:$0xff]
    %v1811 = vld [vmem:[#allocation8 + $0x308] sm:$0xff]
    %v1812 = vld [vmem:[#allocation8 + $0x310] sm:$0xff]
    %v1813 = vld [vmem:[#allocation8 + $0x318] sm:$0xff]
    %v1814 = vld [vmem:[#allocation8 + $0x320] sm:$0xff]
    %v1815 = vld [vmem:[#allocation8 + $0x328] sm:$0xff]
    %v1816 = vld [vmem:[#allocation8 + $0x330] sm:$0xff]
    %v1817 = vld [vmem:[#allocation8 + $0x338] sm:$0xff]
    %v1818 = vld [vmem:[#allocation8 + $0x340] sm:$0xff]
    %v1819 = vld [vmem:[#allocation8 + $0x348] sm:$0xff]
    %v1820 = vld [vmem:[#allocation8 + $0x350] sm:$0xff]
    %v1821 = vld [vmem:[#allocation8 + $0x358] sm:$0xff]
    %v1822 = vld [vmem:[#allocation8 + $0x360] sm:$0xff]
    %v1823 = vld [vmem:[#allocation8 + $0x368] sm:$0xff]
    %v1824 = vld [vmem:[#allocation8 + $0x370] sm:$0xff]
    %v1825 = vld [vmem:[#allocation8 + $0x378] sm:$0xff]
    %v1826 = vld [vmem:[#allocation8 + $0x380] sm:$0xff]
    %v1827 = vld [vmem:[#allocation8 + $0x388] sm:$0xff]
    %v1828 = vld [vmem:[#allocation8 + $0x390] sm:$0xff]
    %v1829 = vld [vmem:[#allocation8 + $0x398] sm:$0xff]
    %v1830 = vld [vmem:[#allocation8 + $0x3a0] sm:$0xff]
    %v1831 = vld [vmem:[#allocation8 + $0x3a8] sm:$0xff]
    %v1832 = vld [vmem:[#allocation8 + $0x3b0] sm:$0xff]
    %v1833 = vld [vmem:[#allocation8 + $0x3b8] sm:$0xff]
    %v1834 = vld [vmem:[#allocation8 + $0x3c0] sm:$0xff]
    %v1835 = vld [vmem:[#allocation8 + $0x3c8] sm:$0xff]
    %v1836 = vld [vmem:[#allocation8 + $0x3d0] sm:$0xff]
    %v1837 = vld [vmem:[#allocation8 + $0x3d8] sm:$0xff]
    %v1838 = vld [vmem:[#allocation8 + $0x3e0] sm:$0xff]
    %v1839 = vld [vmem:[#allocation8 + $0x3e8] sm:$0xff]
    %v1840 = vld [vmem:[#allocation8 + $0x3f0] sm:$0xff]
    %v1841 = vld [vmem:[#allocation8 + $0x3f8] sm:$0xff]
    %v1842 = vld [vmem:[%s4] sm:$0xf]
    %v1844 = vlaneseq
    %v1845 = vshrl.u32 %v1844, 7
    %v1846 = vsub.s32 0, %v1845
    %v1847 = vrot.slane %v1842, %v1846
    %v1848 = vlaneseq
    %v1849 = vshrl.u32 %v1848, 7
    %v1850 = vsub.s32 1, %v1849
    %v1851 = vrot.slane %v1842, %v1850
    %v1852 = vlaneseq
    %v1853 = vshrl.u32 %v1852, 7
    %v1854 = vsub.s32 2, %v1853
    %v1855 = vrot.slane %v1842, %v1854
    %v1856 = vlaneseq
    %v1857 = vshrl.u32 %v1856, 7
    %v1858 = vsub.s32 3, %v1857
    %v1859 = vrot.slane %v1842, %v1858
    %v1992 = vunpack.c.l.b16 %v1714
    %v1993 = vunpack.c.h.b16 %v1714
    %v1994 = vunpack.c.l.b16 %v1715
    %v1995 = vunpack.c.h.b16 %v1715
    %v1996 = vunpack.c.l.b16 %v1716
    %v1997 = vunpack.c.h.b16 %v1716
    %v1998 = vunpack.c.l.b16 %v1717
    %v1999 = vunpack.c.h.b16 %v1717
    %v2000 = vunpack.c.l.b16 %v1718
    %v2001 = vunpack.c.h.b16 %v1718
    %v2002 = vunpack.c.l.b16 %v1719
    %v2003 = vunpack.c.h.b16 %v1719
    %v2004 = vunpack.c.l.b16 %v1720
    %v2005 = vunpack.c.h.b16 %v1720
    %v2006 = vunpack.c.l.b16 %v1721
    %v2007 = vunpack.c.h.b16 %v1721
    %v2008 = vunpack.c.l.b16 %v1722
    %v2009 = vunpack.c.h.b16 %v1722
    %v2010 = vunpack.c.l.b16 %v1723
    %v2011 = vunpack.c.h.b16 %v1723
    %v2012 = vunpack.c.l.b16 %v1724
    %v2013 = vunpack.c.h.b16 %v1724
    %v2014 = vunpack.c.l.b16 %v1725
    %v2015 = vunpack.c.h.b16 %v1725
    %v2016 = vunpack.c.l.b16 %v1726
    %v2017 = vunpack.c.h.b16 %v1726
    %v2018 = vunpack.c.l.b16 %v1727
    %v2019 = vunpack.c.h.b16 %v1727
    %v2020 = vunpack.c.l.b16 %v1728
    %v2021 = vunpack.c.h.b16 %v1728
    %v2022 = vunpack.c.l.b16 %v1729
    %v2023 = vunpack.c.h.b16 %v1729
    %v2024 = vunpack.c.l.b16 %v1730
    %v2025 = vunpack.c.h.b16 %v1730
    %v2026 = vunpack.c.l.b16 %v1731
    %v2027 = vunpack.c.h.b16 %v1731
    %v2028 = vunpack.c.l.b16 %v1732
    %v2029 = vunpack.c.h.b16 %v1732
    %v2030 = vunpack.c.l.b16 %v1733
    %v2031 = vunpack.c.h.b16 %v1733
    %v2032 = vunpack.c.l.b16 %v1734
    %v2033 = vunpack.c.h.b16 %v1734
    %v2034 = vunpack.c.l.b16 %v1735
    %v2035 = vunpack.c.h.b16 %v1735
    %v2036 = vunpack.c.l.b16 %v1736
    %v2037 = vunpack.c.h.b16 %v1736
    %v2038 = vunpack.c.l.b16 %v1737
    %v2039 = vunpack.c.h.b16 %v1737
    %v2040 = vunpack.c.l.b16 %v1738
    %v2041 = vunpack.c.h.b16 %v1738
    %v2042 = vunpack.c.l.b16 %v1739
    %v2043 = vunpack.c.h.b16 %v1739
    %v2044 = vunpack.c.l.b16 %v1740
    %v2045 = vunpack.c.h.b16 %v1740
    %v2046 = vunpack.c.l.b16 %v1741
    %v2047 = vunpack.c.h.b16 %v1741
    %v2048 = vunpack.c.l.b16 %v1742
    %v2049 = vunpack.c.h.b16 %v1742
    %v2050 = vunpack.c.l.b16 %v1743
    %v2051 = vunpack.c.h.b16 %v1743
    %v2052 = vunpack.c.l.b16 %v1744
    %v2053 = vunpack.c.h.b16 %v1744
    %v2054 = vunpack.c.l.b16 %v1745
    %v2055 = vunpack.c.h.b16 %v1745
    %v2056 = vunpack.c.l.b16 %v1746
    %v2057 = vunpack.c.h.b16 %v1746
    %v2058 = vunpack.c.l.b16 %v1747
    %v2059 = vunpack.c.h.b16 %v1747
    %v2060 = vunpack.c.l.b16 %v1748
    %v2061 = vunpack.c.h.b16 %v1748
    %v2062 = vunpack.c.l.b16 %v1749
    %v2063 = vunpack.c.h.b16 %v1749
    %v2064 = vunpack.c.l.b16 %v1750
    %v2065 = vunpack.c.h.b16 %v1750
    %v2066 = vunpack.c.l.b16 %v1751
    %v2067 = vunpack.c.h.b16 %v1751
    %v2068 = vunpack.c.l.b16 %v1752
    %v2069 = vunpack.c.h.b16 %v1752
    %v2070 = vunpack.c.l.b16 %v1753
    %v2071 = vunpack.c.h.b16 %v1753
    %v2072 = vunpack.c.l.b16 %v1754
    %v2073 = vunpack.c.h.b16 %v1754
    %v2074 = vunpack.c.l.b16 %v1755
    %v2075 = vunpack.c.h.b16 %v1755
    %v2076 = vunpack.c.l.b16 %v1756
    %v2077 = vunpack.c.h.b16 %v1756
    %v2078 = vunpack.c.l.b16 %v1757
    %v2079 = vunpack.c.h.b16 %v1757
    %v2080 = vunpack.c.l.b16 %v1758
    %v2081 = vunpack.c.h.b16 %v1758
    %v2082 = vunpack.c.l.b16 %v1759
    %v2083 = vunpack.c.h.b16 %v1759
    %v2084 = vunpack.c.l.b16 %v1760
    %v2085 = vunpack.c.h.b16 %v1760
    %v2086 = vunpack.c.l.b16 %v1761
    %v2087 = vunpack.c.h.b16 %v1761
    %v2088 = vunpack.c.l.b16 %v1762
    %v2089 = vunpack.c.h.b16 %v1762
    %v2090 = vunpack.c.l.b16 %v1763
    %v2091 = vunpack.c.h.b16 %v1763
    %v2092 = vunpack.c.l.b16 %v1764
    %v2093 = vunpack.c.h.b16 %v1764
    %v2094 = vunpack.c.l.b16 %v1765
    %v2095 = vunpack.c.h.b16 %v1765
    %v2096 = vunpack.c.l.b16 %v1766
    %v2097 = vunpack.c.h.b16 %v1766
    %v2098 = vunpack.c.l.b16 %v1767
    %v2099 = vunpack.c.h.b16 %v1767
    %v2100 = vunpack.c.l.b16 %v1768
    %v2101 = vunpack.c.h.b16 %v1768
    %v2102 = vunpack.c.l.b16 %v1769
    %v2103 = vunpack.c.h.b16 %v1769
    %v2104 = vunpack.c.l.b16 %v1770
    %v2105 = vunpack.c.h.b16 %v1770
    %v2106 = vunpack.c.l.b16 %v1771
    %v2107 = vunpack.c.h.b16 %v1771
    %v2108 = vunpack.c.l.b16 %v1772
    %v2109 = vunpack.c.h.b16 %v1772
    %v2110 = vunpack.c.l.b16 %v1773
    %v2111 = vunpack.c.h.b16 %v1773
    %v2112 = vunpack.c.l.b16 %v1774
    %v2113 = vunpack.c.h.b16 %v1774
    %v2114 = vunpack.c.l.b16 %v1775
    %v2115 = vunpack.c.h.b16 %v1775
    %v2116 = vunpack.c.l.b16 %v1776
    %v2117 = vunpack.c.h.b16 %v1776
    %v2118 = vunpack.c.l.b16 %v1777
    %v2119 = vunpack.c.h.b16 %v1777
    %v2120 = vunpack.c.l.b16 %v1778
    %v2121 = vunpack.c.h.b16 %v1778
    %v2122 = vunpack.c.l.b16 %v1779
    %v2123 = vunpack.c.h.b16 %v1779
    %v2124 = vunpack.c.l.b16 %v1780
    %v2125 = vunpack.c.h.b16 %v1780
    %v2126 = vunpack.c.l.b16 %v1781
    %v2127 = vunpack.c.h.b16 %v1781
    %v2128 = vunpack.c.l.b16 %v1782
    %v2129 = vunpack.c.h.b16 %v1782
    %v2130 = vunpack.c.l.b16 %v1783
    %v2131 = vunpack.c.h.b16 %v1783
    %v2132 = vunpack.c.l.b16 %v1784
    %v2133 = vunpack.c.h.b16 %v1784
    %v2134 = vunpack.c.l.b16 %v1785
    %v2135 = vunpack.c.h.b16 %v1785
    %v2136 = vunpack.c.l.b16 %v1786
    %v2137 = vunpack.c.h.b16 %v1786
    %v2138 = vunpack.c.l.b16 %v1787
    %v2139 = vunpack.c.h.b16 %v1787
    %v2140 = vunpack.c.l.b16 %v1788
    %v2141 = vunpack.c.h.b16 %v1788
    %v2142 = vunpack.c.l.b16 %v1789
    %v2143 = vunpack.c.h.b16 %v1789
    %v2144 = vunpack.c.l.b16 %v1790
    %v2145 = vunpack.c.h.b16 %v1790
    %v2146 = vunpack.c.l.b16 %v1791
    %v2147 = vunpack.c.h.b16 %v1791
    %v2148 = vunpack.c.l.b16 %v1792
    %v2149 = vunpack.c.h.b16 %v1792
    %v2150 = vunpack.c.l.b16 %v1793
    %v2151 = vunpack.c.h.b16 %v1793
    %v2152 = vunpack.c.l.b16 %v1794
    %v2153 = vunpack.c.h.b16 %v1794
    %v2154 = vunpack.c.l.b16 %v1795
    %v2155 = vunpack.c.h.b16 %v1795
    %v2156 = vunpack.c.l.b16 %v1796
    %v2157 = vunpack.c.h.b16 %v1796
    %v2158 = vunpack.c.l.b16 %v1797
    %v2159 = vunpack.c.h.b16 %v1797
    %v2160 = vunpack.c.l.b16 %v1798
    %v2161 = vunpack.c.h.b16 %v1798
    %v2162 = vunpack.c.l.b16 %v1799
    %v2163 = vunpack.c.h.b16 %v1799
    %v2164 = vunpack.c.l.b16 %v1800
    %v2165 = vunpack.c.h.b16 %v1800
    %v2166 = vunpack.c.l.b16 %v1801
    %v2167 = vunpack.c.h.b16 %v1801
    %v2168 = vunpack.c.l.b16 %v1802
    %v2169 = vunpack.c.h.b16 %v1802
    %v2170 = vunpack.c.l.b16 %v1803
    %v2171 = vunpack.c.h.b16 %v1803
    %v2172 = vunpack.c.l.b16 %v1804
    %v2173 = vunpack.c.h.b16 %v1804
    %v2174 = vunpack.c.l.b16 %v1805
    %v2175 = vunpack.c.h.b16 %v1805
    %v2176 = vunpack.c.l.b16 %v1806
    %v2177 = vunpack.c.h.b16 %v1806
    %v2178 = vunpack.c.l.b16 %v1807
    %v2179 = vunpack.c.h.b16 %v1807
    %v2180 = vunpack.c.l.b16 %v1808
    %v2181 = vunpack.c.h.b16 %v1808
    %v2182 = vunpack.c.l.b16 %v1809
    %v2183 = vunpack.c.h.b16 %v1809
    %v2184 = vunpack.c.l.b16 %v1810
    %v2185 = vunpack.c.h.b16 %v1810
    %v2186 = vunpack.c.l.b16 %v1811
    %v2187 = vunpack.c.h.b16 %v1811
    %v2188 = vunpack.c.l.b16 %v1812
    %v2189 = vunpack.c.h.b16 %v1812
    %v2190 = vunpack.c.l.b16 %v1813
    %v2191 = vunpack.c.h.b16 %v1813
    %v2192 = vunpack.c.l.b16 %v1814
    %v2193 = vunpack.c.h.b16 %v1814
    %v2194 = vunpack.c.l.b16 %v1815
    %v2195 = vunpack.c.h.b16 %v1815
    %v2196 = vunpack.c.l.b16 %v1816
    %v2197 = vunpack.c.h.b16 %v1816
    %v2198 = vunpack.c.l.b16 %v1817
    %v2199 = vunpack.c.h.b16 %v1817
    %v2200 = vunpack.c.l.b16 %v1818
    %v2201 = vunpack.c.h.b16 %v1818
    %v2202 = vunpack.c.l.b16 %v1819
    %v2203 = vunpack.c.h.b16 %v1819
    %v2204 = vunpack.c.l.b16 %v1820
    %v2205 = vunpack.c.h.b16 %v1820
    %v2206 = vunpack.c.l.b16 %v1821
    %v2207 = vunpack.c.h.b16 %v1821
    %v2208 = vunpack.c.l.b16 %v1822
    %v2209 = vunpack.c.h.b16 %v1822
    %v2210 = vunpack.c.l.b16 %v1823
    %v2211 = vunpack.c.h.b16 %v1823
    %v2212 = vunpack.c.l.b16 %v1824
    %v2213 = vunpack.c.h.b16 %v1824
    %v2214 = vunpack.c.l.b16 %v1825
    %v2215 = vunpack.c.h.b16 %v1825
    %v2216 = vunpack.c.l.b16 %v1826
    %v2217 = vunpack.c.h.b16 %v1826
    %v2218 = vunpack.c.l.b16 %v1827
    %v2219 = vunpack.c.h.b16 %v1827
    %v2220 = vunpack.c.l.b16 %v1828
    %v2221 = vunpack.c.h.b16 %v1828
    %v2222 = vunpack.c.l.b16 %v1829
    %v2223 = vunpack.c.h.b16 %v1829
    %v2224 = vunpack.c.l.b16 %v1830
    %v2225 = vunpack.c.h.b16 %v1830
    %v2226 = vunpack.c.l.b16 %v1831
    %v2227 = vunpack.c.h.b16 %v1831
    %v2228 = vunpack.c.l.b16 %v1832
    %v2229 = vunpack.c.h.b16 %v1832
    %v2230 = vunpack.c.l.b16 %v1833
    %v2231 = vunpack.c.h.b16 %v1833
    %v2232 = vunpack.c.l.b16 %v1834
    %v2233 = vunpack.c.h.b16 %v1834
    %v2234 = vunpack.c.l.b16 %v1835
    %v2235 = vunpack.c.h.b16 %v1835
    %v2236 = vunpack.c.l.b16 %v1836
    %v2237 = vunpack.c.h.b16 %v1836
    %v2238 = vunpack.c.l.b16 %v1837
    %v2239 = vunpack.c.h.b16 %v1837
    %v2240 = vunpack.c.l.b16 %v1838
    %v2241 = vunpack.c.h.b16 %v1838
    %v2242 = vunpack.c.l.b16 %v1839
    %v2243 = vunpack.c.h.b16 %v1839
    %v2244 = vunpack.c.l.b16 %v1840
    %v2245 = vunpack.c.h.b16 %v1840
    %v2246 = vunpack.c.l.b16 %v1841
    %v2247 = vunpack.c.h.b16 %v1841
    %v2248 = vpack.c.b16 %v1996, %v1992
    %v2249 = vpack.c.b16 %v1997, %v1993
    %v2250 = vpack.c.b16 %v1998, %v1994
    %v2251 = vpack.c.b16 %v1999, %v1995
    %v2252 = vpack.c.b16 %v2004, %v2000
    %v2253 = vpack.c.b16 %v2005, %v2001
    %v2254 = vpack.c.b16 %v2006, %v2002
    %v2255 = vpack.c.b16 %v2007, %v2003
    %v2256 = vpack.c.b16 %v2012, %v2008
    %v2257 = vpack.c.b16 %v2013, %v2009
    %v2258 = vpack.c.b16 %v2014, %v2010
    %v2259 = vpack.c.b16 %v2015, %v2011
    %v2260 = vpack.c.b16 %v2020, %v2016
    %v2261 = vpack.c.b16 %v2021, %v2017
    %v2262 = vpack.c.b16 %v2022, %v2018
    %v2263 = vpack.c.b16 %v2023, %v2019
    %v2264 = vpack.c.b16 %v2028, %v2024
    %v2265 = vpack.c.b16 %v2029, %v2025
    %v2266 = vpack.c.b16 %v2030, %v2026
    %v2267 = vpack.c.b16 %v2031, %v2027
    %v2268 = vpack.c.b16 %v2036, %v2032
    %v2269 = vpack.c.b16 %v2037, %v2033
    %v2270 = vpack.c.b16 %v2038, %v2034
    %v2271 = vpack.c.b16 %v2039, %v2035
    %v2272 = vpack.c.b16 %v2044, %v2040
    %v2273 = vpack.c.b16 %v2045, %v2041
    %v2274 = vpack.c.b16 %v2046, %v2042
    %v2275 = vpack.c.b16 %v2047, %v2043
    %v2276 = vpack.c.b16 %v2052, %v2048
    %v2277 = vpack.c.b16 %v2053, %v2049
    %v2278 = vpack.c.b16 %v2054, %v2050
    %v2279 = vpack.c.b16 %v2055, %v2051
    %v2280 = vpack.c.b16 %v2060, %v2056
    %v2281 = vpack.c.b16 %v2061, %v2057
    %v2282 = vpack.c.b16 %v2062, %v2058
    %v2283 = vpack.c.b16 %v2063, %v2059
    %v2284 = vpack.c.b16 %v2068, %v2064
    %v2285 = vpack.c.b16 %v2069, %v2065
    %v2286 = vpack.c.b16 %v2070, %v2066
    %v2287 = vpack.c.b16 %v2071, %v2067
    %v2288 = vpack.c.b16 %v2076, %v2072
    %v2289 = vpack.c.b16 %v2077, %v2073
    %v2290 = vpack.c.b16 %v2078, %v2074
    %v2291 = vpack.c.b16 %v2079, %v2075
    %v2292 = vpack.c.b16 %v2084, %v2080
    %v2293 = vpack.c.b16 %v2085, %v2081
    %v2294 = vpack.c.b16 %v2086, %v2082
    %v2295 = vpack.c.b16 %v2087, %v2083
    %v2296 = vpack.c.b16 %v2092, %v2088
    %v2297 = vpack.c.b16 %v2093, %v2089
    %v2298 = vpack.c.b16 %v2094, %v2090
    %v2299 = vpack.c.b16 %v2095, %v2091
    %v2300 = vpack.c.b16 %v2100, %v2096
    %v2301 = vpack.c.b16 %v2101, %v2097
    %v2302 = vpack.c.b16 %v2102, %v2098
    %v2303 = vpack.c.b16 %v2103, %v2099
    %v2304 = vpack.c.b16 %v2108, %v2104
    %v2305 = vpack.c.b16 %v2109, %v2105
    %v2306 = vpack.c.b16 %v2110, %v2106
    %v2307 = vpack.c.b16 %v2111, %v2107
    %v2308 = vpack.c.b16 %v2116, %v2112
    %v2309 = vpack.c.b16 %v2117, %v2113
    %v2310 = vpack.c.b16 %v2118, %v2114
    %v2311 = vpack.c.b16 %v2119, %v2115
    %v2312 = vpack.c.b16 %v2124, %v2120
    %v2313 = vpack.c.b16 %v2125, %v2121
    %v2314 = vpack.c.b16 %v2126, %v2122
    %v2315 = vpack.c.b16 %v2127, %v2123
    %v2316 = vpack.c.b16 %v2132, %v2128
    %v2317 = vpack.c.b16 %v2133, %v2129
    %v2318 = vpack.c.b16 %v2134, %v2130
    %v2319 = vpack.c.b16 %v2135, %v2131
    %v2320 = vpack.c.b16 %v2140, %v2136
    %v2321 = vpack.c.b16 %v2141, %v2137
    %v2322 = vpack.c.b16 %v2142, %v2138
    %v2323 = vpack.c.b16 %v2143, %v2139
    %v2324 = vpack.c.b16 %v2148, %v2144
    %v2325 = vpack.c.b16 %v2149, %v2145
    %v2326 = vpack.c.b16 %v2150, %v2146
    %v2327 = vpack.c.b16 %v2151, %v2147
    %v2328 = vpack.c.b16 %v2156, %v2152
    %v2329 = vpack.c.b16 %v2157, %v2153
    %v2330 = vpack.c.b16 %v2158, %v2154
    %v2331 = vpack.c.b16 %v2159, %v2155
    %v2332 = vpack.c.b16 %v2164, %v2160
    %v2333 = vpack.c.b16 %v2165, %v2161
    %v2334 = vpack.c.b16 %v2166, %v2162
    %v2335 = vpack.c.b16 %v2167, %v2163
    %v2336 = vpack.c.b16 %v2172, %v2168
    %v2337 = vpack.c.b16 %v2173, %v2169
    %v2338 = vpack.c.b16 %v2174, %v2170
    %v2339 = vpack.c.b16 %v2175, %v2171
    %v2340 = vpack.c.b16 %v2180, %v2176
    %v2341 = vpack.c.b16 %v2181, %v2177
    %v2342 = vpack.c.b16 %v2182, %v2178
    %v2343 = vpack.c.b16 %v2183, %v2179
    %v2344 = vpack.c.b16 %v2188, %v2184
    %v2345 = vpack.c.b16 %v2189, %v2185
    %v2346 = vpack.c.b16 %v2190, %v2186
    %v2347 = vpack.c.b16 %v2191, %v2187
    %v2348 = vpack.c.b16 %v2196, %v2192
    %v2349 = vpack.c.b16 %v2197, %v2193
    %v2350 = vpack.c.b16 %v2198, %v2194
    %v2351 = vpack.c.b16 %v2199, %v2195
    %v2352 = vpack.c.b16 %v2204, %v2200
    %v2353 = vpack.c.b16 %v2205, %v2201
    %v2354 = vpack.c.b16 %v2206, %v2202
    %v2355 = vpack.c.b16 %v2207, %v2203
    %v2356 = vpack.c.b16 %v2212, %v2208
    %v2357 = vpack.c.b16 %v2213, %v2209
    %v2358 = vpack.c.b16 %v2214, %v2210
    %v2359 = vpack.c.b16 %v2215, %v2211
    %v2360 = vpack.c.b16 %v2220, %v2216
    %v2361 = vpack.c.b16 %v2221, %v2217
    %v2362 = vpack.c.b16 %v2222, %v2218
    %v2363 = vpack.c.b16 %v2223, %v2219
    %v2364 = vpack.c.b16 %v2228, %v2224
    %v2365 = vpack.c.b16 %v2229, %v2225
    %v2366 = vpack.c.b16 %v2230, %v2226
    %v2367 = vpack.c.b16 %v2231, %v2227
    %v2368 = vpack.c.b16 %v2236, %v2232
    %v2369 = vpack.c.b16 %v2237, %v2233
    %v2370 = vpack.c.b16 %v2238, %v2234
    %v2371 = vpack.c.b16 %v2239, %v2235
    %v2372 = vpack.c.b16 %v2244, %v2240
    %v2373 = vpack.c.b16 %v2245, %v2241
    %v2374 = vpack.c.b16 %v2246, %v2242
    %v2375 = vpack.c.b16 %v2247, %v2243
    %2504 = vmatprep.subr.bf16.mxu0 %v2277
    %2505 = vmatpush1.bf16.msra.mxu0 %v2276
    %2506 = vmatprep.subr.bf16.mxu0 %v2273
    %2507 = vmatpush1.bf16.msra.mxu0 %v2272
    %2508 = vmatprep.subr.bf16.mxu0 %v2269
    %2509 = vmatpush1.bf16.msra.mxu0 %v2268
    %2510 = vmatprep.subr.bf16.mxu0 %v2265
    %2511 = vmatpush1.bf16.msra.mxu0 %v2264
    %2512 = vmatprep.subr.bf16.mxu0 %v2261
    %2513 = vmatpush1.bf16.msra.mxu0 %v2260
    %2514 = vmatprep.subr.bf16.mxu0 %v2257
    %2515 = vmatpush1.bf16.msra.mxu0 %v2256
    %2516 = vmatprep.subr.bf16.mxu0 %v2253
    %2517 = vmatpush1.bf16.msra.mxu0 %v2252
    %2518 = vmatprep.subr.bf16.mxu0 %v2249
    %2519 = vmatpush1.bf16.msra.mxu0 %v2248
    %2520 = vmatprep.subr.bf16.mxu0 %v2309
    %2521 = vmatpush2.bf16.msra.mxu0 %v2308
    %2522 = vmatprep.subr.bf16.mxu0 %v2305
    %2523 = vmatpush2.bf16.msra.mxu0 %v2304
    %2524 = vmatprep.subr.bf16.mxu0 %v2301
    %2525 = vmatpush2.bf16.msra.mxu0 %v2300
    %2526 = vmatprep.subr.bf16.mxu0 %v2297
    %2527 = vmatpush2.bf16.msra.mxu0 %v2296
    %2528 = vmatprep.subr.bf16.mxu0 %v2293
    %2529 = vmatpush2.bf16.msra.mxu0 %v2292
    %2530 = vmatprep.subr.bf16.mxu0 %v2289
    %2531 = vmatpush2.bf16.msra.mxu0 %v2288
    %2532 = vmatprep.subr.bf16.mxu0 %v2285
    %2533 = vmatpush2.bf16.msra.mxu0 %v2284
    %2534 = vmatprep.subr.bf16.mxu0 %v2281
    %2535 = vmatpush2.bf16.msra.mxu0 %v2280
    %2536 = vmatprep.mubr.bf16.mxu0 %v1711
    %2537 = vmatmul.mubr.bf16.gmra.mxu0 %v1710
    %v2538 = vpop.f32.mrf.mxu0
    %v2539 = vadd.f32 %v1847, %v2538
    %v2540 = vpop.f32.mrf.mxu0
    %v2541 = vadd.f32 %v1851, %v2540
    %v2542 = vpop.f32.mrf.mxu0
    %v2543 = vpop.f32.mrf.mxu0
    %2544 = vdwg.mxu0
    %2545 = vmatprep.subr.bf16.mxu0 %v2341
    %2546 = vmatpush1.bf16.msra.mxu0 %v2340
    %2547 = vmatprep.subr.bf16.mxu0 %v2337
    %2548 = vmatpush1.bf16.msra.mxu0 %v2336
    %2549 = vmatprep.subr.bf16.mxu0 %v2333
    %2550 = vmatpush1.bf16.msra.mxu0 %v2332
    %2551 = vmatprep.subr.bf16.mxu0 %v2329
    %2552 = vmatpush1.bf16.msra.mxu0 %v2328
    %2553 = vmatprep.subr.bf16.mxu0 %v2325
    %2554 = vmatpush1.bf16.msra.mxu0 %v2324
    %2555 = vmatprep.subr.bf16.mxu0 %v2321
    %2556 = vmatpush1.bf16.msra.mxu0 %v2320
    %2557 = vmatprep.subr.bf16.mxu0 %v2317
    %2558 = vmatpush1.bf16.msra.mxu0 %v2316
    %2559 = vmatprep.subr.bf16.mxu0 %v2313
    %2560 = vmatpush1.bf16.msra.mxu0 %v2312
    %2561 = vmatprep.subr.bf16.mxu0 %v2373
    %2562 = vmatpush2.bf16.msra.mxu0 %v2372
    %2563 = vmatprep.subr.bf16.mxu0 %v2369
    %2564 = vmatpush2.bf16.msra.mxu0 %v2368
    %2565 = vmatprep.subr.bf16.mxu0 %v2365
    %2566 = vmatpush2.bf16.msra.mxu0 %v2364
    %2567 = vmatprep.subr.bf16.mxu0 %v2361
    %2568 = vmatpush2.bf16.msra.mxu0 %v2360
    %2569 = vmatprep.subr.bf16.mxu0 %v2357
    %2570 = vmatpush2.bf16.msra.mxu0 %v2356
    %2571 = vmatprep.subr.bf16.mxu0 %v2353
    %2572 = vmatpush2.bf16.msra.mxu0 %v2352
    %2573 = vmatprep.subr.bf16.mxu0 %v2349
    %2574 = vmatpush2.bf16.msra.mxu0 %v2348
    %2575 = vmatprep.subr.bf16.mxu0 %v2345
    %2576 = vmatpush2.bf16.msra.mxu0 %v2344
    %2577 = vmatprep.mubr.bf16.mxu0 %v1713
    %2578 = vmatmul.mubr.bf16.gmra.mxu0 %v1712
    %v2579 = vpop.f32.mrf.mxu0
    %v2580 = vadd.f32 %v2539, %v2579
    %v2581 = vpop.f32.mrf.mxu0
    %v2582 = vadd.f32 %v2541, %v2581
    %v2583 = vpop.f32.mrf.mxu0
    %v2584 = vpop.f32.mrf.mxu0
    %2585 = vdwg.mxu0
    %2586 = vmatprep.subr.bf16.mxu0 %v2279
    %2587 = vmatpush1.bf16.msra.mxu0 %v2278
    %2588 = vmatprep.subr.bf16.mxu0 %v2275
    %2589 = vmatpush1.bf16.msra.mxu0 %v2274
    %2590 = vmatprep.subr.bf16.mxu0 %v2271
    %2591 = vmatpush1.bf16.msra.mxu0 %v2270
    %2592 = vmatprep.subr.bf16.mxu0 %v2267
    %2593 = vmatpush1.bf16.msra.mxu0 %v2266
    %2594 = vmatprep.subr.bf16.mxu0 %v2263
    %2595 = vmatpush1.bf16.msra.mxu0 %v2262
    %2596 = vmatprep.subr.bf16.mxu0 %v2259
    %2597 = vmatpush1.bf16.msra.mxu0 %v2258
    %2598 = vmatprep.subr.bf16.mxu0 %v2255
    %2599 = vmatpush1.bf16.msra.mxu0 %v2254
    %2600 = vmatprep.subr.bf16.mxu0 %v2251
    %2601 = vmatpush1.bf16.msra.mxu0 %v2250
    %2602 = vmatprep.subr.bf16.mxu0 %v2311
    %2603 = vmatpush2.bf16.msra.mxu0 %v2310
    %2604 = vmatprep.subr.bf16.mxu0 %v2307
    %2605 = vmatpush2.bf16.msra.mxu0 %v2306
    %2606 = vmatprep.subr.bf16.mxu0 %v2303
    %2607 = vmatpush2.bf16.msra.mxu0 %v2302
    %2608 = vmatprep.subr.bf16.mxu0 %v2299
    %2609 = vmatpush2.bf16.msra.mxu0 %v2298
    %2610 = vmatprep.subr.bf16.mxu0 %v2295
    %2611 = vmatpush2.bf16.msra.mxu0 %v2294
    %2612 = vmatprep.subr.bf16.mxu0 %v2291
    %2613 = vmatpush2.bf16.msra.mxu0 %v2290
    %2614 = vmatprep.subr.bf16.mxu0 %v2287
    %2615 = vmatpush2.bf16.msra.mxu0 %v2286
    %2616 = vmatprep.subr.bf16.mxu0 %v2283
    %2617 = vmatpush2.bf16.msra.mxu0 %v2282
    %2618 = vmatprep.mubr.bf16.mxu0 %v1711
    %2619 = vmatmul.mubr.bf16.gmra.mxu0 %v1710
    %v2620 = vpop.f32.mrf.mxu0
    %v2621 = vadd.f32 %v1855, %v2620
    %v2622 = vpop.f32.mrf.mxu0
    %v2623 = vadd.f32 %v1859, %v2622
    %v2624 = vpop.f32.mrf.mxu0
    %v2625 = vpop.f32.mrf.mxu0
    %2626 = vdwg.mxu0
    %2627 = vmatprep.subr.bf16.mxu0 %v2343
    %2628 = vmatpush1.bf16.msra.mxu0 %v2342
    %2629 = vmatprep.subr.bf16.mxu0 %v2339
    %2630 = vmatpush1.bf16.msra.mxu0 %v2338
    %2631 = vmatprep.subr.bf16.mxu0 %v2335
    %2632 = vmatpush1.bf16.msra.mxu0 %v2334
    %2633 = vmatprep.subr.bf16.mxu0 %v2331
    %2634 = vmatpush1.bf16.msra.mxu0 %v2330
    %2635 = vmatprep.subr.bf16.mxu0 %v2327
    %2636 = vmatpush1.bf16.msra.mxu0 %v2326
    %2637 = vmatprep.subr.bf16.mxu0 %v2323
    %2638 = vmatpush1.bf16.msra.mxu0 %v2322
    %2639 = vmatprep.subr.bf16.mxu0 %v2319
    %2640 = vmatpush1.bf16.msra.mxu0 %v2318
    %2641 = vmatprep.subr.bf16.mxu0 %v2315
    %2642 = vmatpush1.bf16.msra.mxu0 %v2314
    %2643 = vmatprep.subr.bf16.mxu0 %v2375
    %2644 = vmatpush2.bf16.msra.mxu0 %v2374
    %2645 = vmatprep.subr.bf16.mxu0 %v2371
    %2646 = vmatpush2.bf16.msra.mxu0 %v2370
    %2647 = vmatprep.subr.bf16.mxu0 %v2367
    %2648 = vmatpush2.bf16.msra.mxu0 %v2366
    %2649 = vmatprep.subr.bf16.mxu0 %v2363
    %2650 = vmatpush2.bf16.msra.mxu0 %v2362
    %2651 = vmatprep.subr.bf16.mxu0 %v2359
    %2652 = vmatpush2.bf16.msra.mxu0 %v2358
    %2653 = vmatprep.subr.bf16.mxu0 %v2355
    %2654 = vmatpush2.bf16.msra.mxu0 %v2354
    %2655 = vmatprep.subr.bf16.mxu0 %v2351
    %2656 = vmatpush2.bf16.msra.mxu0 %v2350
    %2657 = vmatprep.subr.bf16.mxu0 %v2347
    %2658 = vmatpush2.bf16.msra.mxu0 %v2346
    %2659 = vmatprep.mubr.bf16.mxu0 %v1713
    %2660 = vmatmul.mubr.bf16.gmra.mxu0 %v1712
    %v2661 = vpop.f32.mrf.mxu0
    %v2662 = vadd.f32 %v2621, %v2661
    %v2663 = vpop.f32.mrf.mxu0
    %v2664 = vadd.f32 %v2623, %v2663
    %v2665 = vpop.f32.mrf.mxu0
    %v2666 = vpop.f32.mrf.mxu0
    %2667 = vdwg.mxu0
    %v2668 = vmax.f32 %v2580, 0.0
    %v2669 = vmax.f32 %v2582, 0.0
    %v2670 = vmax.f32 %v2662, 0.0
    %v2671 = vmax.f32 %v2664, 0.0
    %v2676 = vcombine.low %v2668, %v2669
    %v2677 = vcombine.high %v2668, %v2669
    %v2678 = vcombine.low %v2670, %v2671
    %v2679 = vcombine.high %v2670, %v2671
    %v2681 = vunpack.c.l.s4 1983009808
    %v2682 = vunpack.c.0.s8 %v2681
    %v2683 = vlaneseq
    %v2684 = vshrl.u32 %v2683, 7
    %v2685 = vsub.s32 %v2682, %v2684
    %v2686 = vrot.slane %v2676, %v2685
    %v2688 = vunpack.c.l.s4 1983009808
    %v2689 = vunpack.c.0.s8 %v2688
    %v2690 = vlaneseq
    %v2691 = vshrl.u32 %v2690, 7
    %v2692 = vsub.s32 %v2689, %v2691
    %v2693 = vrot.slane %v2677, %v2692
    %v2695 = vunpack.c.l.s4 1983009808
    %v2696 = vunpack.c.0.s8 %v2695
    %v2697 = vlaneseq
    %v2698 = vshrl.u32 %v2697, 7
    %v2699 = vsub.s32 %v2696, %v2698
    %v2700 = vrot.slane %v2678, %v2699
    %v2702 = vunpack.c.l.s4 1983009808
    %v2703 = vunpack.c.0.s8 %v2702
    %v2704 = vlaneseq
    %v2705 = vshrl.u32 %v2704, 7
    %v2706 = vsub.s32 %v2703, %v2705
    %v2707 = vrot.slane %v2679, %v2706
    %v2708 = vcombine.low %v2686, %v2700
    %v2709 = vcombine.high %v2686, %v2700
    %v2710 = vcombine.low %v2693, %v2707
    %v2711 = vcombine.high %v2693, %v2707
    %2716 = vst [vmem:[#allocation10] sm:$0xff] %v2708
    %2717 = vst [vmem:[#allocation10 + $0x8] sm:$0xff] %v2709
    %2718 = vst [vmem:[#allocation10 + $0x10] sm:$0xff] %v2710
    %2719 = vst [vmem:[#allocation10 + $0x18] sm:$0xff] %v2711
    // Predicated region
    $region38: #{tpu_custom_call.1} parent=1 // pred_check
      _
    $region39: #{tpu_custom_call.1} parent=1 // pred_check_branch
      %2721 = sbr.rel (0) target = $region41
    $region40: #{tpu_custom_call.1} parent=1 // pred_region
      %s2723 = ssub.s32 512, 128
      %2724 = vsyncadd [#allocation4], %s2723
      %s2725 = sshll.u32 [#allocation10], 4
      %s2726 = int_to_ptr.vmem [resolvable:$true] %s2725
      %2731 = dma.vmem_to_hbm [thread:$0]  %s2726, 128, %s5, [#allocation4], 128, 128, 8
    $region41: #{tpu_custom_call.1} parent=1 // pred_fallthru
      _
    // Predicated region
    $region42: #{tpu_custom_call.1} parent=1 // pred_check
      _
    $region43: #{tpu_custom_call.1} parent=1 // pred_check_branch
      %2733 = sbr.rel (0) target = $region45
    $region44: #{tpu_custom_call.1} parent=1 // pred_region
      %2734 = dma.done [#allocation4], 512
    $region45: #{tpu_custom_call.1} parent=1 // pred_fallthru
      _
    %2735 = vsyncpa [#allocation3], 1
    %2736 = vsyncpa [#allocation6], 1
    %2737 = vsyncpa [#allocation9], 1
    %2738 = vsyncpa [#allocation4], 1

</llo_original>
